<compile_context>
chip_gen: v6e
topology: v6e:2x2x1
jax: 0.10.0
libtpu: 0.0.40
codegen_flags: <defaults>
</compile_context>

<pallas_src>
import functools
import numpy as np
import jax
import jax.numpy as jnp
from jax.experimental import pallas as pl
from jax.experimental.pallas import tpu as pltpu


# ------------------------------- fused kernel -------------------------------

def _fused_forward_kernel(x_ref, pos_ref, avg_ref, w1_ref, b1_ref, w2_ref, b2_ref,
                          w3_ref, b3_ref, w4_ref, b4_ref,
                          awt_ref, ab_ref, av_ref, dw1_ref, db1_ref, dw2_ref, db2_ref,
                          o_ref, *, R, L):
    """One grid step = one batch sample: R length-L ROI sequences on W = R*L lanes."""
    f32, bf16 = jnp.float32, jnp.bfloat16
    W = R * L
    pos = pos_ref[...]                                   # (1, W) int32: lane position inside its ROI

    def dconv(h, wm_ref, b_ref, d):
        # k=3 "same" conv at lane dilation d (valid lanes: pos % d == 0), folded-BN bias, ReLU.
        left = jnp.where(pos == 0, 0.0, pltpu.roll(h, d, axis=1))            # h[l-d], zero pad
        right = jnp.where(pos == L - d, 0.0, pltpu.roll(h, W - d, axis=1))   # h[l+d], zero pad
        xcol = jnp.concatenate([left, h, right], axis=0).astype(bf16)        # (3*Cin, W) im2col
        y = jnp.dot(wm_ref[...].astype(bf16), xcol, preferred_element_type=f32)
        return jnp.maximum(y + b_ref[...], 0.0)

    def dpool(y, d):
        # MaxPool1d(2) at lane stride d; valid stride becomes 2*d (lanes never compacted).
        return jnp.maximum(y, pltpu.roll(y, W - d, axis=1))

    # --- block 1 (C_in = 1): pure-VPU broadcast MAC in f32 (MXU would be a degenerate outer
    #     product; f32 VPU keeps v5e, which has no bf16 VALU, on its fast path) ---
    h0 = x_ref[0]                                                            # (1, W)
    left = jnp.where(pos == 0, 0.0, pltpu.roll(h0, 1, axis=1))
    right = jnp.where(pos == L - 1, 0.0, pltpu.roll(h0, W - 1, axis=1))
    w1 = w1_ref[...]                                                         # (C1, 3) taps
    y = w1[:, 0:1] * left + w1[:, 1:2] * h0 + w1[:, 2:3] * right
    h = dpool(jnp.maximum(y + b1_ref[...], 0.0), 1)                          # valid stride 2

    # --- blocks 2..4: one bf16 im2col MXU matmul per block over all R sequences at once ---
    h = dpool(dconv(h, w2_ref, b2_ref, 2), 2)                                # valid stride 4
    h = dpool(dconv(h, w3_ref, b3_ref, 4), 4)                                # valid stride 8
    y4 = dconv(h, w4_ref, b4_ref, 8)                                         # (F, W), valid stride 8

    # --- AdaptiveAvgPool1d(1): featsT (R, F) = avg (R, W) . y4 (F, W)^T (contract lane axes).
    #     avg is a host-precomputed lane-dense selector (1/(L//8) at the valid lanes). ---
    featsT = jax.lax.dot_general(avg_ref[...].astype(bf16), y4.astype(bf16),
                                 dimension_numbers=(((1,), (1,)), ((), ())),
                                 preferred_element_type=f32)                 # (R, F)

    # --- additive attention over the R ROIs of this sample (per-sample softmax by construction) ---
    hatt = jnp.tanh(jnp.dot(featsT.astype(bf16), awt_ref[...].astype(bf16),
                            preferred_element_type=f32) + ab_ref[...])       # (R, H)
    e = jnp.sum(hatt * av_ref[...], axis=1, keepdims=True)                   # (R, 1) VPU/XLU
    pexp = jnp.exp(e - jnp.max(e, axis=0, keepdims=True))                    # per-sample max
    alpha = pexp * pl.reciprocal(jnp.sum(pexp, axis=0, keepdims=True), approx=True)
    wfeat = featsT * alpha                                                   # (R, F)

    # --- torch .flatten(1): dec_w1 rows were permuted on the host to (r*F + f) order, so the
    #     flatten is just a lane-concat of the R rows (no gather/place matmuls). ---
    xdec = jnp.concatenate([wfeat[r:r + 1, :] for r in range(R)], axis=1)    # (1, R*F)

    # --- MLP decoder ---
    hid = jnp.maximum(jnp.dot(xdec.astype(bf16), dw1_ref[...].astype(bf16),
                              preferred_element_type=f32) + db1_ref[...], 0.0)
    # TODO(synk): dropout is identity (eval mode); training-mode dropout not implemented.
    o_ref[0] = jnp.dot(hid.astype(bf16), dw2_ref[...].astype(bf16),
                       preferred_element_type=f32) + db2_ref[...]


def sccnn_attention_forward(x, params):
    """x: (B, num_roi, L) float32 -> logits (B, n_classes); grid over batch, parallel on v7x."""
    B, R, L = x.shape
    assert L % 8 == 0
    W = R * L
    F = params["w4"].shape[0]
    H = params["att_wt"].shape[0]
    Dh = params["dec_w1"].shape[1]
    C = params["dec_w2"].shape[1]

    # Host-precomputed constants (kept out of the kernel per the perf review).
    lane = np.arange(W)
    pos_host = jnp.asarray((lane % L).astype(np.int32).reshape(1, W))
    sel = ((lane // L)[None, :] == np.arange(R)[:, None]) & ((lane % L) % 8 == 0)
    avg_host = jnp.asarray((sel / float(L // 8)).astype(np.float32))         # (R, W)

    # Host-side layout plumbing for the lane-dense tail.
    att_wt_t = params["att_wt"].T                                            # (F, H)
    att_b_row = params["att_b"].reshape(1, H)
    att_v_row = params["att_v"].reshape(1, H)
    dw1_perm = params["dec_w1"].reshape(F, R, Dh).transpose(1, 0, 2).reshape(R * F, Dh)
    db1_row = params["dec_b1"].reshape(1, Dh)
    db2_row = params["dec_b2"].reshape(1, C)

    x3 = x.reshape(B, 1, W)                                                  # sample b -> block b
    args = (x3, pos_host, avg_host,
            params["w1"], params["b1"], params["w2"], params["b2"],
            params["w3"], params["b3"], params["w4"], params["b4"],
            att_wt_t, att_b_row, att_v_row, dw1_perm, db1_row, params["dec_w2"], db2_row)

    kernel = functools.partial(_fused_forward_kernel, R=R, L=L)
    in_specs = [pl.BlockSpec((1, 1, W), lambda b: (b, 0, 0))]
    in_specs += [pl.BlockSpec(a.shape, lambda b: (0, 0)) for a in args[1:]]

    out = pl.pallas_call(
        kernel,
        grid=(B,),
        out_shape=jax.ShapeDtypeStruct((B, 1, C), jnp.float32),
        in_specs=in_specs,
        out_specs=pl.BlockSpec((1, 1, C), lambda b: (b, 0, 0)),
        compiler_params=pltpu.CompilerParams(dimension_semantics=("parallel",)),
    )(*args)
    return out.reshape(B, C)


# --------------------------- parameter construction ---------------------------

def _fold_bn(w, b, gamma, beta, mean, var, eps=1e-5):
    s = gamma / jnp.sqrt(var + eps)
    return w * s[:, None, None], (b - mean) * s + beta


def init_params(key, *, num_roi=4, out_f=32, att_hidden=16, dec_hidden=64, n_classes=2):
    cfg = [(1, 8), (8, 16), (16, 32), (32, out_f)]
    K = 3
    keys = jax.random.split(key, 4 * len(cfg) + 7)
    it = iter(keys)
    p = {}
    for i, (cin, cout) in enumerate(cfg, start=1):
        w = 0.3 * jax.random.normal(next(it), (cout, cin, K), jnp.float32)
        b = 0.1 * jax.random.normal(next(it), (cout,), jnp.float32)
        gamma = 1.0 + 0.1 * jax.random.normal(next(it), (cout,), jnp.float32)
        beta = 0.05 * jax.random.normal(next(it), (cout,), jnp.float32)
        mean = jnp.zeros((cout,), jnp.float32)
        var = jnp.ones((cout,), jnp.float32)
        wf, bf = _fold_bn(w, b, gamma, beta, mean, var)              # eval-mode BN folded in
        p[f"w{i}"] = jnp.transpose(wf, (0, 2, 1)).reshape(cout, K * cin)   # tap-major im2col layout
        p[f"b{i}"] = bf.reshape(cout, 1)
    p["att_wt"] = 0.2 * jax.random.normal(next(it), (att_hidden, out_f), jnp.float32)
    p["att_b"] = 0.05 * jax.random.normal(next(it), (att_hidden,), jnp.float32)
    p["att_v"] = 0.2 * jax.random.normal(next(it), (att_hidden,), jnp.float32)
    d_in = num_roi * out_f
    p["dec_w1"] = 0.1 * jax.random.normal(next(it), (d_in, dec_hidden), jnp.float32)
    p["dec_b1"] = 0.05 * jax.random.normal(next(it), (dec_hidden,), jnp.float32)
    p["dec_w2"] = 0.1 * jax.random.normal(next(it), (dec_hidden, n_classes), jnp.float32)
    p["dec_b2"] = 0.05 * jax.random.normal(next(it), (n_classes,), jnp.float32)
    return p


# ------------------------------ pure-JAX reference ------------------------------

def _reference_forward(x, p):
    """XLA oracle with the kernel's numerics policy: bf16 MXU operands, f32 accumulation,
    f32 everywhere else (block 1 is f32 on the VPU in the kernel, hence HIGHEST here)."""
    B, R, L = x.shape
    f32, bf16 = jnp.float32, jnp.bfloat16
    h = x.reshape(B * R, 1, L)

    def im2col(h):
        Lc = h.shape[-1]
        hp = jnp.pad(h, ((0, 0), (0, 0), (1, 1)))
        return jnp.concatenate([hp[:, :, k:k + Lc] for k in range(3)], axis=1)

    def max_pool(y):
        return jnp.maximum(y[:, :, 0::2], y[:, :, 1::2])

    # block 1: exact f32 (kernel does it on the VPU in f32)
    y = jnp.einsum("oc,ncl->nol", p["w1"], im2col(h),
                   precision=jax.lax.Precision.HIGHEST) + p["b1"][None]
    h = max_pool(jnp.maximum(y, 0.0))
    # blocks 2..4: bf16 operands, f32 accumulation (matches the kernel's MXU dots)
    for i in (2, 3, 4):
        y = jnp.einsum("oc,ncl->nol", p[f"w{i}"].astype(bf16), im2col(h).astype(bf16),
                       preferred_element_type=f32) + p[f"b{i}"][None]
        h = jnp.maximum(y, 0.0)
        if i < 4:
            h = max_pool(h)

    feats = jnp.mean(h.astype(bf16).astype(f32), axis=-1)          # AdaptiveAvgPool1d(1): (B*R, F)
    F_ = feats.shape[-1]
    feats = feats.reshape(B, R, F_)

    hatt = jnp.tanh(jnp.einsum("brf,hf->brh", feats.astype(bf16), p["att_wt"].astype(bf16),
                               preferred_element_type=f32) + p["att_b"][None, None, :])
    e = jnp.sum(hatt * p["att_v"][None, None, :], axis=-1)          # (B, R)
    alpha = jax.nn.softmax(e, axis=-1)[:, :, None]
    wfeat = feats * alpha                                           # (B, R, F)
    xdec = wfeat.transpose(0, 2, 1).reshape(B, F_ * R)              # torch .flatten(1): f*R + r
    hid = jnp.maximum(jnp.dot(xdec.astype(bf16), p["dec_w1"].astype(bf16),
                              preferred_element_type=f32) + p["dec_b1"][None, :], 0.0)
    return jnp.dot(hid.astype(bf16), p["dec_w2"].astype(bf16),
                   preferred_element_type=f32) + p["dec_b2"][None, :]


# ---------------------------------- main ----------------------------------

if __name__ == "__main__":
    key = jax.random.PRNGKey(0)
    kx, kp = jax.random.split(key)
    B, R, L = 2, 4, 128
    x = jax.random.normal(kx, (B, R, L), jnp.float32)
    params = init_params(kp, num_roi=R)

    out = jax.block_until_ready(jax.jit(sccnn_attention_forward)(x, params))
    ref = _reference_forward(x, params)

    assert out.shape == (B, 2), out.shape
    assert bool(jnp.all(jnp.isfinite(out)))
    assert bool(jnp.allclose(out, ref, rtol=5e-3, atol=5e-3)), (out, ref)
    print("KERNEL_OK")
</pallas_src>

<mosaic_0001>
module attributes {stable_mosaic.version = 11 : i64} {
  func.func @_fused_forward_kernel(%arg0: i32, %arg1: memref<1x1x512xf32, #tpu.memory_space<vmem>>, %arg2: memref<1x512xi32, #tpu.memory_space<vmem>>, %arg3: memref<4x512xf32, #tpu.memory_space<vmem>>, %arg4: memref<8x3xf32, #tpu.memory_space<vmem>>, %arg5: memref<8x1xf32, #tpu.memory_space<vmem>>, %arg6: memref<16x24xf32, #tpu.memory_space<vmem>>, %arg7: memref<16x1xf32, #tpu.memory_space<vmem>>, %arg8: memref<32x48xf32, #tpu.memory_space<vmem>>, %arg9: memref<32x1xf32, #tpu.memory_space<vmem>>, %arg10: memref<32x96xf32, #tpu.memory_space<vmem>>, %arg11: memref<32x1xf32, #tpu.memory_space<vmem>>, %arg12: memref<32x16xf32, #tpu.memory_space<vmem>>, %arg13: memref<1x16xf32, #tpu.memory_space<vmem>>, %arg14: memref<1x16xf32, #tpu.memory_space<vmem>>, %arg15: memref<128x64xf32, #tpu.memory_space<vmem>>, %arg16: memref<1x64xf32, #tpu.memory_space<vmem>>, %arg17: memref<64x2xf32, #tpu.memory_space<vmem>>, %arg18: memref<1x2xf32, #tpu.memory_space<vmem>>, %arg19: memref<1x1x2xf32, #tpu.memory_space<vmem>>) attributes {dimension_semantics = [#tpu.dimension_semantics<parallel>], iteration_bounds = array<i64: 2>, scalar_prefetch = 0 : i64, scratch_operands = 0 : i64, tpu.core_type = #tpu.core_type<tc>, window_params = [{transform_indices = @transform_0, window_bounds = array<i64: 1, 1, 512>}, {pipeline_mode = #tpu.pipeline_mode<synchronous>, transform_indices = @transform_1, window_bounds = array<i64: 1, 512>}, {pipeline_mode = #tpu.pipeline_mode<synchronous>, transform_indices = @transform_2, window_bounds = array<i64: 4, 512>}, {pipeline_mode = #tpu.pipeline_mode<synchronous>, transform_indices = @transform_3, window_bounds = array<i64: 8, 3>}, {pipeline_mode = #tpu.pipeline_mode<synchronous>, transform_indices = @transform_4, window_bounds = array<i64: 8, 1>}, {pipeline_mode = #tpu.pipeline_mode<synchronous>, transform_indices = @transform_5, window_bounds = array<i64: 16, 24>}, {pipeline_mode = #tpu.pipeline_mode<synchronous>, transform_indices = @transform_6, window_bounds = array<i64: 16, 1>}, {pipeline_mode = #tpu.pipeline_mode<synchronous>, transform_indices = @transform_7, window_bounds = array<i64: 32, 48>}, {pipeline_mode = #tpu.pipeline_mode<synchronous>, transform_indices = @transform_8, window_bounds = array<i64: 32, 1>}, {pipeline_mode = #tpu.pipeline_mode<synchronous>, transform_indices = @transform_9, window_bounds = array<i64: 32, 96>}, {pipeline_mode = #tpu.pipeline_mode<synchronous>, transform_indices = @transform_10, window_bounds = array<i64: 32, 1>}, {pipeline_mode = #tpu.pipeline_mode<synchronous>, transform_indices = @transform_11, window_bounds = array<i64: 32, 16>}, {pipeline_mode = #tpu.pipeline_mode<synchronous>, transform_indices = @transform_12, window_bounds = array<i64: 1, 16>}, {pipeline_mode = #tpu.pipeline_mode<synchronous>, transform_indices = @transform_13, window_bounds = array<i64: 1, 16>}, {pipeline_mode = #tpu.pipeline_mode<synchronous>, transform_indices = @transform_14, window_bounds = array<i64: 128, 64>}, {pipeline_mode = #tpu.pipeline_mode<synchronous>, transform_indices = @transform_15, window_bounds = array<i64: 1, 64>}, {pipeline_mode = #tpu.pipeline_mode<synchronous>, transform_indices = @transform_16, window_bounds = array<i64: 64, 2>}, {pipeline_mode = #tpu.pipeline_mode<synchronous>, transform_indices = @transform_17, window_bounds = array<i64: 1, 2>}, {transform_indices = @transform_18, window_bounds = array<i64: 1, 1, 2>}]} {
    %c0 = arith.constant 0 : index
    %c0_0 = arith.constant 0 : index
    %0 = vector.load %arg2[%c0, %c0_0] : memref<1x512xi32, #tpu.memory_space<vmem>>, vector<1x512xi32>
    %c0_1 = arith.constant 0 : index
    %c0_2 = arith.constant 0 : index
    %c0_3 = arith.constant 0 : index
    %1 = vector.load %arg1[%c0_1, %c0_2, %c0_3] : memref<1x1x512xf32, #tpu.memory_space<vmem>>, vector<1x1x512xf32>
    %2 = vector.shape_cast %1 : vector<1x1x512xf32> to vector<1x512xf32>
    %c0_i32 = arith.constant 0 : i32
    %3 = vector.broadcast %c0_i32 : i32 to vector<1x512xi32>
    %4 = arith.cmpi eq, %0, %3 : vector<1x512xi32>
    %c1_i32 = arith.constant 1 : i32
    %5 = tpu.dynamic_rotate %2 by %c1_i32 dim 1 : vector<1x512xf32>, i32 -> vector<1x512xf32>
    %cst = arith.constant 0.000000e+00 : f32
    %6 = vector.broadcast %cst : f32 to vector<1x512xf32>
    %7 = arith.select %4, %6, %5 : vector<1x512xi1>, vector<1x512xf32>
    %c127_i32 = arith.constant 127 : i32
    %8 = vector.broadcast %c127_i32 : i32 to vector<1x512xi32>
    %9 = arith.cmpi eq, %0, %8 : vector<1x512xi32>
    %c511_i32 = arith.constant 511 : i32
    %10 = tpu.dynamic_rotate %2 by %c511_i32 dim 1 : vector<1x512xf32>, i32 -> vector<1x512xf32>
    %cst_4 = arith.constant 0.000000e+00 : f32
    %11 = vector.broadcast %cst_4 : f32 to vector<1x512xf32>
    %12 = arith.select %9, %11, %10 : vector<1x512xi1>, vector<1x512xf32>
    %c0_5 = arith.constant 0 : index
    %c0_6 = arith.constant 0 : index
    %13 = vector.load %arg4[%c0_5, %c0_6] : memref<8x3xf32, #tpu.memory_space<vmem>>, vector<8x3xf32>
    %14 = vector.extract_strided_slice %13 {offsets = [0, 0], sizes = [8, 1], strides = [1, 1]} : vector<8x3xf32> to vector<8x1xf32>
    %15 = vector.broadcast %14 : vector<8x1xf32> to vector<8x512xf32>
    %16 = vector.broadcast %7 : vector<1x512xf32> to vector<8x512xf32>
    %17 = arith.mulf %15, %16 : vector<8x512xf32>
    %18 = vector.extract_strided_slice %13 {offsets = [0, 1], sizes = [8, 1], strides = [1, 1]} : vector<8x3xf32> to vector<8x1xf32>
    %19 = vector.broadcast %18 : vector<8x1xf32> to vector<8x512xf32>
    %20 = vector.broadcast %2 : vector<1x512xf32> to vector<8x512xf32>
    %21 = arith.mulf %19, %20 : vector<8x512xf32>
    %22 = arith.addf %17, %21 : vector<8x512xf32>
    %23 = vector.extract_strided_slice %13 {offsets = [0, 2], sizes = [8, 1], strides = [1, 1]} : vector<8x3xf32> to vector<8x1xf32>
    %24 = vector.broadcast %23 : vector<8x1xf32> to vector<8x512xf32>
    %25 = vector.broadcast %12 : vector<1x512xf32> to vector<8x512xf32>
    %26 = arith.mulf %24, %25 : vector<8x512xf32>
    %27 = arith.addf %22, %26 : vector<8x512xf32>
    %c0_7 = arith.constant 0 : index
    %c0_8 = arith.constant 0 : index
    %28 = vector.load %arg5[%c0_7, %c0_8] : memref<8x1xf32, #tpu.memory_space<vmem>>, vector<8x1xf32>
    %29 = vector.broadcast %28 : vector<8x1xf32> to vector<8x512xf32>
    %30 = arith.addf %27, %29 : vector<8x512xf32>
    %cst_9 = arith.constant 0.000000e+00 : f32
    %31 = vector.broadcast %cst_9 : f32 to vector<8x512xf32>
    %32 = arith.maximumf %30, %31 : vector<8x512xf32>
    %c511_i32_10 = arith.constant 511 : i32
    %33 = tpu.dynamic_rotate %32 by %c511_i32_10 dim 1 : vector<8x512xf32>, i32 -> vector<8x512xf32>
    %34 = arith.maximumf %32, %33 : vector<8x512xf32>
    %c0_i32_11 = arith.constant 0 : i32
    %35 = vector.broadcast %c0_i32_11 : i32 to vector<1x512xi32>
    %36 = arith.cmpi eq, %0, %35 : vector<1x512xi32>
    %c2_i32 = arith.constant 2 : i32
    %37 = tpu.dynamic_rotate %34 by %c2_i32 dim 1 : vector<8x512xf32>, i32 -> vector<8x512xf32>
    %cst_12 = arith.constant 0.000000e+00 : f32
    %38 = vector.shape_cast %36 : vector<1x512xi1> to vector<1x512xi1>
    %39 = vector.broadcast %38 : vector<1x512xi1> to vector<8x512xi1>
    %40 = vector.broadcast %cst_12 : f32 to vector<8x512xf32>
    %41 = arith.select %39, %40, %37 : vector<8x512xi1>, vector<8x512xf32>
    %c126_i32 = arith.constant 126 : i32
    %42 = vector.broadcast %c126_i32 : i32 to vector<1x512xi32>
    %43 = arith.cmpi eq, %0, %42 : vector<1x512xi32>
    %c510_i32 = arith.constant 510 : i32
    %44 = tpu.dynamic_rotate %34 by %c510_i32 dim 1 : vector<8x512xf32>, i32 -> vector<8x512xf32>
    %cst_13 = arith.constant 0.000000e+00 : f32
    %45 = vector.shape_cast %43 : vector<1x512xi1> to vector<1x512xi1>
    %46 = vector.broadcast %45 : vector<1x512xi1> to vector<8x512xi1>
    %47 = vector.broadcast %cst_13 : f32 to vector<8x512xf32>
    %48 = arith.select %46, %47, %44 : vector<8x512xi1>, vector<8x512xf32>
    %49 = tpu.concatenate %41, %34, %48 in 0 : vector<8x512xf32>, vector<8x512xf32>, vector<8x512xf32> -> vector<24x512xf32>
    %50 = arith.truncf %49 : vector<24x512xf32> to vector<24x512xbf16>
    %c0_14 = arith.constant 0 : index
    %c0_15 = arith.constant 0 : index
    %51 = vector.load %arg6[%c0_14, %c0_15] : memref<16x24xf32, #tpu.memory_space<vmem>>, vector<16x24xf32>
    %52 = arith.truncf %51 : vector<16x24xf32> to vector<16x24xbf16>
    %cst_16 = arith.constant dense<0.000000e+00> : vector<16x512xf32>
    %53 = tpu.matmul %52, %50, %cst_16 {dimension_numbers = #tpu.dot_dimension_numbers<[1], [0], [0], [1], [0, 0, 1, 1], [], []>} : vector<16x24xbf16>, vector<24x512xbf16>, vector<16x512xf32> -> vector<16x512xf32>
    %c0_17 = arith.constant 0 : index
    %c0_18 = arith.constant 0 : index
    %54 = vector.load %arg7[%c0_17, %c0_18] : memref<16x1xf32, #tpu.memory_space<vmem>>, vector<16x1xf32>
    %55 = vector.broadcast %54 : vector<16x1xf32> to vector<16x512xf32>
    %56 = arith.addf %53, %55 : vector<16x512xf32>
    %cst_19 = arith.constant 0.000000e+00 : f32
    %57 = vector.broadcast %cst_19 : f32 to vector<16x512xf32>
    %58 = arith.maximumf %56, %57 : vector<16x512xf32>
    %c510_i32_20 = arith.constant 510 : i32
    %59 = tpu.dynamic_rotate %58 by %c510_i32_20 dim 1 : vector<16x512xf32>, i32 -> vector<16x512xf32>
    %60 = arith.maximumf %58, %59 : vector<16x512xf32>
    %c0_i32_21 = arith.constant 0 : i32
    %61 = vector.broadcast %c0_i32_21 : i32 to vector<1x512xi32>
    %62 = arith.cmpi eq, %0, %61 : vector<1x512xi32>
    %c4_i32 = arith.constant 4 : i32
    %63 = tpu.dynamic_rotate %60 by %c4_i32 dim 1 : vector<16x512xf32>, i32 -> vector<16x512xf32>
    %cst_22 = arith.constant 0.000000e+00 : f32
    %64 = vector.shape_cast %62 : vector<1x512xi1> to vector<1x512xi1>
    %65 = vector.broadcast %64 : vector<1x512xi1> to vector<16x512xi1>
    %66 = vector.broadcast %cst_22 : f32 to vector<16x512xf32>
    %67 = arith.select %65, %66, %63 : vector<16x512xi1>, vector<16x512xf32>
    %c124_i32 = arith.constant 124 : i32
    %68 = vector.broadcast %c124_i32 : i32 to vector<1x512xi32>
    %69 = arith.cmpi eq, %0, %68 : vector<1x512xi32>
    %c508_i32 = arith.constant 508 : i32
    %70 = tpu.dynamic_rotate %60 by %c508_i32 dim 1 : vector<16x512xf32>, i32 -> vector<16x512xf32>
    %cst_23 = arith.constant 0.000000e+00 : f32
    %71 = vector.shape_cast %69 : vector<1x512xi1> to vector<1x512xi1>
    %72 = vector.broadcast %71 : vector<1x512xi1> to vector<16x512xi1>
    %73 = vector.broadcast %cst_23 : f32 to vector<16x512xf32>
    %74 = arith.select %72, %73, %70 : vector<16x512xi1>, vector<16x512xf32>
    %75 = tpu.concatenate %67, %60, %74 in 0 : vector<16x512xf32>, vector<16x512xf32>, vector<16x512xf32> -> vector<48x512xf32>
    %76 = arith.truncf %75 : vector<48x512xf32> to vector<48x512xbf16>
    %c0_24 = arith.constant 0 : index
    %c0_25 = arith.constant 0 : index
    %77 = vector.load %arg8[%c0_24, %c0_25] : memref<32x48xf32, #tpu.memory_space<vmem>>, vector<32x48xf32>
    %78 = arith.truncf %77 : vector<32x48xf32> to vector<32x48xbf16>
    %cst_26 = arith.constant dense<0.000000e+00> : vector<32x512xf32>
    %79 = tpu.matmul %78, %76, %cst_26 {dimension_numbers = #tpu.dot_dimension_numbers<[1], [0], [0], [1], [0, 0, 1, 1], [], []>} : vector<32x48xbf16>, vector<48x512xbf16>, vector<32x512xf32> -> vector<32x512xf32>
    %c0_27 = arith.constant 0 : index
    %c0_28 = arith.constant 0 : index
    %80 = vector.load %arg9[%c0_27, %c0_28] : memref<32x1xf32, #tpu.memory_space<vmem>>, vector<32x1xf32>
    %81 = vector.broadcast %80 : vector<32x1xf32> to vector<32x512xf32>
    %82 = arith.addf %79, %81 : vector<32x512xf32>
    %cst_29 = arith.constant 0.000000e+00 : f32
    %83 = vector.broadcast %cst_29 : f32 to vector<32x512xf32>
    %84 = arith.maximumf %82, %83 : vector<32x512xf32>
    %c508_i32_30 = arith.constant 508 : i32
    %85 = tpu.dynamic_rotate %84 by %c508_i32_30 dim 1 : vector<32x512xf32>, i32 -> vector<32x512xf32>
    %86 = arith.maximumf %84, %85 : vector<32x512xf32>
    %c0_i32_31 = arith.constant 0 : i32
    %87 = vector.broadcast %c0_i32_31 : i32 to vector<1x512xi32>
    %88 = arith.cmpi eq, %0, %87 : vector<1x512xi32>
    %c8_i32 = arith.constant 8 : i32
    %89 = tpu.dynamic_rotate %86 by %c8_i32 dim 1 : vector<32x512xf32>, i32 -> vector<32x512xf32>
    %cst_32 = arith.constant 0.000000e+00 : f32
    %90 = vector.shape_cast %88 : vector<1x512xi1> to vector<1x512xi1>
    %91 = vector.broadcast %90 : vector<1x512xi1> to vector<32x512xi1>
    %92 = vector.broadcast %cst_32 : f32 to vector<32x512xf32>
    %93 = arith.select %91, %92, %89 : vector<32x512xi1>, vector<32x512xf32>
    %c120_i32 = arith.constant 120 : i32
    %94 = vector.broadcast %c120_i32 : i32 to vector<1x512xi32>
    %95 = arith.cmpi eq, %0, %94 : vector<1x512xi32>
    %c504_i32 = arith.constant 504 : i32
    %96 = tpu.dynamic_rotate %86 by %c504_i32 dim 1 : vector<32x512xf32>, i32 -> vector<32x512xf32>
    %cst_33 = arith.constant 0.000000e+00 : f32
    %97 = vector.shape_cast %95 : vector<1x512xi1> to vector<1x512xi1>
    %98 = vector.broadcast %97 : vector<1x512xi1> to vector<32x512xi1>
    %99 = vector.broadcast %cst_33 : f32 to vector<32x512xf32>
    %100 = arith.select %98, %99, %96 : vector<32x512xi1>, vector<32x512xf32>
    %101 = tpu.concatenate %93, %86, %100 in 0 : vector<32x512xf32>, vector<32x512xf32>, vector<32x512xf32> -> vector<96x512xf32>
    %102 = arith.truncf %101 : vector<96x512xf32> to vector<96x512xbf16>
    %c0_34 = arith.constant 0 : index
    %c0_35 = arith.constant 0 : index
    %103 = vector.load %arg10[%c0_34, %c0_35] : memref<32x96xf32, #tpu.memory_space<vmem>>, vector<32x96xf32>
    %104 = arith.truncf %103 : vector<32x96xf32> to vector<32x96xbf16>
    %cst_36 = arith.constant dense<0.000000e+00> : vector<32x512xf32>
    %105 = tpu.matmul %104, %102, %cst_36 {dimension_numbers = #tpu.dot_dimension_numbers<[1], [0], [0], [1], [0, 0, 1, 1], [], []>} : vector<32x96xbf16>, vector<96x512xbf16>, vector<32x512xf32> -> vector<32x512xf32>
    %c0_37 = arith.constant 0 : index
    %c0_38 = arith.constant 0 : index
    %106 = vector.load %arg11[%c0_37, %c0_38] : memref<32x1xf32, #tpu.memory_space<vmem>>, vector<32x1xf32>
    %107 = vector.broadcast %106 : vector<32x1xf32> to vector<32x512xf32>
    %108 = arith.addf %105, %107 : vector<32x512xf32>
    %cst_39 = arith.constant 0.000000e+00 : f32
    %109 = vector.broadcast %cst_39 : f32 to vector<32x512xf32>
    %110 = arith.maximumf %108, %109 : vector<32x512xf32>
    %c0_40 = arith.constant 0 : index
    %c0_41 = arith.constant 0 : index
    %111 = vector.load %arg3[%c0_40, %c0_41] : memref<4x512xf32, #tpu.memory_space<vmem>>, vector<4x512xf32>
    %112 = arith.truncf %111 : vector<4x512xf32> to vector<4x512xbf16>
    %113 = arith.truncf %110 : vector<32x512xf32> to vector<32x512xbf16>
    %cst_42 = arith.constant dense<0.000000e+00> : vector<4x32xf32>
    %114 = tpu.matmul %112, %113, %cst_42 {dimension_numbers = #tpu.dot_dimension_numbers<[1], [1], [0], [0], [0, 0, 1, 0], [], []>} : vector<4x512xbf16>, vector<32x512xbf16>, vector<4x32xf32> -> vector<4x32xf32>
    %115 = arith.truncf %114 : vector<4x32xf32> to vector<4x32xbf16>
    %c0_43 = arith.constant 0 : index
    %c0_44 = arith.constant 0 : index
    %116 = vector.load %arg12[%c0_43, %c0_44] : memref<32x16xf32, #tpu.memory_space<vmem>>, vector<32x16xf32>
    %117 = arith.truncf %116 : vector<32x16xf32> to vector<32x16xbf16>
    %cst_45 = arith.constant dense<0.000000e+00> : vector<4x16xf32>
    %118 = tpu.matmul %115, %117, %cst_45 {dimension_numbers = #tpu.dot_dimension_numbers<[1], [0], [0], [1], [0, 0, 1, 1], [], []>} : vector<4x32xbf16>, vector<32x16xbf16>, vector<4x16xf32> -> vector<4x16xf32>
    %c0_46 = arith.constant 0 : index
    %c0_47 = arith.constant 0 : index
    %119 = vector.load %arg13[%c0_46, %c0_47] : memref<1x16xf32, #tpu.memory_space<vmem>>, vector<1x16xf32>
    %120 = vector.broadcast %119 : vector<1x16xf32> to vector<4x16xf32>
    %121 = arith.addf %118, %120 : vector<4x16xf32>
    %122 = math.tanh %121 : vector<4x16xf32>
    %c0_48 = arith.constant 0 : index
    %c0_49 = arith.constant 0 : index
    %123 = vector.load %arg14[%c0_48, %c0_49] : memref<1x16xf32, #tpu.memory_space<vmem>>, vector<1x16xf32>
    %124 = vector.broadcast %123 : vector<1x16xf32> to vector<4x16xf32>
    %125 = arith.mulf %122, %124 : vector<4x16xf32>
    %cst_50 = arith.constant dense<0.000000e+00> : vector<4xf32>
    %126 = vector.multi_reduction <add>, %125, %cst_50 [1] : vector<4x16xf32> to vector<4xf32>
    %127 = vector.shape_cast %126 : vector<4xf32> to vector<4x1xf32>
    %cst_51 = arith.constant dense<0xFF800000> : vector<1xf32>
    %128 = vector.multi_reduction <maximumf>, %127, %cst_51 [0] : vector<4x1xf32> to vector<1xf32>
    %129 = vector.shape_cast %128 : vector<1xf32> to vector<1x1xf32>
    %130 = vector.broadcast %129 : vector<1x1xf32> to vector<4x1xf32>
    %131 = arith.subf %127, %130 : vector<4x1xf32>
    %132 = math.exp %131 : vector<4x1xf32>
    %cst_52 = arith.constant dense<0.000000e+00> : vector<1xf32>
    %133 = vector.multi_reduction <add>, %132, %cst_52 [0] : vector<4x1xf32> to vector<1xf32>
    %134 = vector.shape_cast %133 : vector<1xf32> to vector<1x1xf32>
    %135 = tpu.reciprocal %134 {approx = true} : vector<1x1xf32> -> vector<1x1xf32>
    %136 = vector.broadcast %135 : vector<1x1xf32> to vector<4x1xf32>
    %137 = arith.mulf %132, %136 : vector<4x1xf32>
    %138 = vector.broadcast %137 : vector<4x1xf32> to vector<4x32xf32>
    %139 = arith.mulf %114, %138 : vector<4x32xf32>
    %140 = vector.extract_strided_slice %139 {offsets = [0, 0], sizes = [1, 32], strides = [1, 1]} : vector<4x32xf32> to vector<1x32xf32>
    %141 = vector.extract_strided_slice %139 {offsets = [1, 0], sizes = [1, 32], strides = [1, 1]} : vector<4x32xf32> to vector<1x32xf32>
    %142 = vector.extract_strided_slice %139 {offsets = [2, 0], sizes = [1, 32], strides = [1, 1]} : vector<4x32xf32> to vector<1x32xf32>
    %143 = vector.extract_strided_slice %139 {offsets = [3, 0], sizes = [1, 32], strides = [1, 1]} : vector<4x32xf32> to vector<1x32xf32>
    %144 = tpu.concatenate %140, %141, %142, %143 in 1 : vector<1x32xf32>, vector<1x32xf32>, vector<1x32xf32>, vector<1x32xf32> -> vector<1x128xf32>
    %145 = arith.truncf %144 : vector<1x128xf32> to vector<1x128xbf16>
    %c0_53 = arith.constant 0 : index
    %c0_54 = arith.constant 0 : index
    %146 = vector.load %arg15[%c0_53, %c0_54] : memref<128x64xf32, #tpu.memory_space<vmem>>, vector<128x64xf32>
    %147 = arith.truncf %146 : vector<128x64xf32> to vector<128x64xbf16>
    %cst_55 = arith.constant dense<0.000000e+00> : vector<1x64xf32>
    %148 = tpu.matmul %145, %147, %cst_55 {dimension_numbers = #tpu.dot_dimension_numbers<[1], [0], [0], [1], [0, 0, 1, 1], [], []>} : vector<1x128xbf16>, vector<128x64xbf16>, vector<1x64xf32> -> vector<1x64xf32>
    %c0_56 = arith.constant 0 : index
    %c0_57 = arith.constant 0 : index
    %149 = vector.load %arg16[%c0_56, %c0_57] : memref<1x64xf32, #tpu.memory_space<vmem>>, vector<1x64xf32>
    %150 = arith.addf %148, %149 : vector<1x64xf32>
    %cst_58 = arith.constant 0.000000e+00 : f32
    %151 = vector.broadcast %cst_58 : f32 to vector<1x64xf32>
    %152 = arith.maximumf %150, %151 : vector<1x64xf32>
    %153 = arith.truncf %152 : vector<1x64xf32> to vector<1x64xbf16>
    %c0_59 = arith.constant 0 : index
    %c0_60 = arith.constant 0 : index
    %154 = vector.load %arg17[%c0_59, %c0_60] : memref<64x2xf32, #tpu.memory_space<vmem>>, vector<64x2xf32>
    %155 = arith.truncf %154 : vector<64x2xf32> to vector<64x2xbf16>
    %cst_61 = arith.constant dense<0.000000e+00> : vector<1x2xf32>
    %156 = tpu.matmul %153, %155, %cst_61 {dimension_numbers = #tpu.dot_dimension_numbers<[1], [0], [0], [1], [0, 0, 1, 1], [], []>} : vector<1x64xbf16>, vector<64x2xbf16>, vector<1x2xf32> -> vector<1x2xf32>
    %c0_62 = arith.constant 0 : index
    %c0_63 = arith.constant 0 : index
    %157 = vector.load %arg18[%c0_62, %c0_63] : memref<1x2xf32, #tpu.memory_space<vmem>>, vector<1x2xf32>
    %158 = arith.addf %156, %157 : vector<1x2xf32>
    %c0_64 = arith.constant 0 : index
    %c0_65 = arith.constant 0 : index
    %c0_66 = arith.constant 0 : index
    %159 = vector.load %arg19[%c0_64, %c0_65, %c0_66] : memref<1x1x2xf32, #tpu.memory_space<vmem>>, vector<1x1x2xf32>
    %160 = vector.shape_cast %159 : vector<1x1x2xf32> to vector<1x2xf32>
    %161 = vector.shape_cast %158 : vector<1x2xf32> to vector<1x1x2xf32>
    tpu.vector_store %arg19[%c0_64, %c0_65, %c0_66], %161 {strides = array<i32>} : memref<1x1x2xf32, #tpu.memory_space<vmem>>, vector<1x1x2xf32>,
    return
  }
  func.func @transform_0(%arg0: i32) -> (i32, i32, i32) {
    %c0_i32 = arith.constant 0 : i32
    %c0_i32_0 = arith.constant 0 : i32
    %c0_i32_1 = arith.constant 0 : i32
    return %arg0, %c0_i32, %c0_i32_0 : i32, i32, i32
  }
  func.func @transform_1(%arg0: i32) -> (i32, i32) {
    %c0_i32 = arith.constant 0 : i32
    %c0_i32_0 = arith.constant 0 : i32
    %c0_i32_1 = arith.constant 0 : i32
    return %c0_i32, %c0_i32_0 : i32, i32
  }
  func.func @transform_2(%arg0: i32) -> (i32, i32) {
    %c0_i32 = arith.constant 0 : i32
    %c0_i32_0 = arith.constant 0 : i32
    %c0_i32_1 = arith.constant 0 : i32
    return %c0_i32, %c0_i32_0 : i32, i32
  }
  func.func @transform_3(%arg0: i32) -> (i32, i32) {
    %c0_i32 = arith.constant 0 : i32
    %c0_i32_0 = arith.constant 0 : i32
    %c0_i32_1 = arith.constant 0 : i32
    return %c0_i32, %c0_i32_0 : i32, i32
  }
  func.func @transform_4(%arg0: i32) -> (i32, i32) {
    %c0_i32 = arith.constant 0 : i32
    %c0_i32_0 = arith.constant 0 : i32
    %c0_i32_1 = arith.constant 0 : i32
    return %c0_i32, %c0_i32_0 : i32, i32
  }
  func.func @transform_5(%arg0: i32) -> (i32, i32) {
    %c0_i32 = arith.constant 0 : i32
    %c0_i32_0 = arith.constant 0 : i32
    %c0_i32_1 = arith.constant 0 : i32
    return %c0_i32, %c0_i32_0 : i32, i32
  }
  func.func @transform_6(%arg0: i32) -> (i32, i32) {
    %c0_i32 = arith.constant 0 : i32
    %c0_i32_0 = arith.constant 0 : i32
    %c0_i32_1 = arith.constant 0 : i32
    return %c0_i32, %c0_i32_0 : i32, i32
  }
  func.func @transform_7(%arg0: i32) -> (i32, i32) {
    %c0_i32 = arith.constant 0 : i32
    %c0_i32_0 = arith.constant 0 : i32
    %c0_i32_1 = arith.constant 0 : i32
    return %c0_i32, %c0_i32_0 : i32, i32
  }
  func.func @transform_8(%arg0: i32) -> (i32, i32) {
    %c0_i32 = arith.constant 0 : i32
    %c0_i32_0 = arith.constant 0 : i32
    %c0_i32_1 = arith.constant 0 : i32
    return %c0_i32, %c0_i32_0 : i32, i32
  }
  func.func @transform_9(%arg0: i32) -> (i32, i32) {
    %c0_i32 = arith.constant 0 : i32
    %c0_i32_0 = arith.constant 0 : i32
    %c0_i32_1 = arith.constant 0 : i32
    return %c0_i32, %c0_i32_0 : i32, i32
  }
  func.func @transform_10(%arg0: i32) -> (i32, i32) {
    %c0_i32 = arith.constant 0 : i32
    %c0_i32_0 = arith.constant 0 : i32
    %c0_i32_1 = arith.constant 0 : i32
    return %c0_i32, %c0_i32_0 : i32, i32
  }
  func.func @transform_11(%arg0: i32) -> (i32, i32) {
    %c0_i32 = arith.constant 0 : i32
    %c0_i32_0 = arith.constant 0 : i32
    %c0_i32_1 = arith.constant 0 : i32
    return %c0_i32, %c0_i32_0 : i32, i32
  }
  func.func @transform_12(%arg0: i32) -> (i32, i32) {
    %c0_i32 = arith.constant 0 : i32
    %c0_i32_0 = arith.constant 0 : i32
    %c0_i32_1 = arith.constant 0 : i32
    return %c0_i32, %c0_i32_0 : i32, i32
  }
  func.func @transform_13(%arg0: i32) -> (i32, i32) {
    %c0_i32 = arith.constant 0 : i32
    %c0_i32_0 = arith.constant 0 : i32
    %c0_i32_1 = arith.constant 0 : i32
    return %c0_i32, %c0_i32_0 : i32, i32
  }
  func.func @transform_14(%arg0: i32) -> (i32, i32) {
    %c0_i32 = arith.constant 0 : i32
    %c0_i32_0 = arith.constant 0 : i32
    %c0_i32_1 = arith.constant 0 : i32
    return %c0_i32, %c0_i32_0 : i32, i32
  }
  func.func @transform_15(%arg0: i32) -> (i32, i32) {
    %c0_i32 = arith.constant 0 : i32
    %c0_i32_0 = arith.constant 0 : i32
    %c0_i32_1 = arith.constant 0 : i32
    return %c0_i32, %c0_i32_0 : i32, i32
  }
  func.func @transform_16(%arg0: i32) -> (i32, i32) {
    %c0_i32 = arith.constant 0 : i32
    %c0_i32_0 = arith.constant 0 : i32
    %c0_i32_1 = arith.constant 0 : i32
    return %c0_i32, %c0_i32_0 : i32, i32
  }
  func.func @transform_17(%arg0: i32) -> (i32, i32) {
    %c0_i32 = arith.constant 0 : i32
    %c0_i32_0 = arith.constant 0 : i32
    %c0_i32_1 = arith.constant 0 : i32
    return %c0_i32, %c0_i32_0 : i32, i32
  }
  func.func @transform_18(%arg0: i32) -> (i32, i32, i32) {
    %c0_i32 = arith.constant 0 : i32
    %c0_i32_0 = arith.constant 0 : i32
    %c0_i32_1 = arith.constant 0 : i32
    return %arg0, %c0_i32, %c0_i32_0 : i32, i32, i32
  }
}

</mosaic_0001>

<llo_original>
// kernel: sccnn_attention_forward.1
$region0: #{sccnn_attention_forward.1}
  #allocation0 [shape = 'u32[]', space=smem, size = 0x4, offset = 0x4, fixed_abs, tag = 'smem constant byte address 0x4 - core index']
  #allocation1 [shape = 'u32[144,128]{1,0:T(1,128)}', space=vmem, size = 0x12000, scoped, tag = 'internal scratch']
  %s0 = inlined_call_operand.vmem [shape: f32[2,1,512], index: 0, kind: input, shape index: {}]
  %s1 = inlined_call_operand.vmem [shape: s32[1,512], index: 1, kind: input, shape index: {}]
  %s2 = inlined_call_operand.vmem [shape: f32[4,512], index: 2, kind: input, shape index: {}]
  %s3 = inlined_call_operand.vmem [shape: f32[8,3], index: 3, kind: input, shape index: {}]
  %s4 = inlined_call_operand.vmem [shape: f32[8,1], index: 4, kind: input, shape index: {}]
  %s5 = inlined_call_operand.vmem [shape: f32[16,24], index: 5, kind: input, shape index: {}]
  %s6 = inlined_call_operand.vmem [shape: f32[16,1], index: 6, kind: input, shape index: {}]
  %s7 = inlined_call_operand.vmem [shape: f32[32,48], index: 7, kind: input, shape index: {}]
  %s8 = inlined_call_operand.vmem [shape: f32[32,1], index: 8, kind: input, shape index: {}]
  %s9 = inlined_call_operand.vmem [shape: f32[32,96], index: 9, kind: input, shape index: {}]
  %s10 = inlined_call_operand.vmem [shape: f32[32,1], index: 10, kind: input, shape index: {}]
  %s11 = inlined_call_operand.vmem [shape: f32[32,16], index: 11, kind: input, shape index: {}]
  %s12 = inlined_call_operand.vmem [shape: f32[1,16], index: 12, kind: input, shape index: {}]
  %s13 = inlined_call_operand.vmem [shape: f32[1,16], index: 13, kind: input, shape index: {}]
  %s14 = inlined_call_operand.vmem [shape: f32[128,64], index: 14, kind: input, shape index: {}]
  %s15 = inlined_call_operand.vmem [shape: f32[1,64], index: 15, kind: input, shape index: {}]
  %s16 = inlined_call_operand.vmem [shape: f32[64,2], index: 16, kind: input, shape index: {}]
  %s17 = inlined_call_operand.vmem [shape: f32[1,2], index: 17, kind: input, shape index: {}]
  %s18 = inlined_call_operand.hbm [shape: f32[2,1,2], index: 18, kind: output, shape index: {}]
  %s19 = sld [smem:[#allocation0]]
  $region105: #{sccnn_attention_forward.1} parent=0
    _
  %s21 = ssub.s32 1, %s19
  %s22 = scalar_select 0, %s21, %s19
  $region1: #{sccnn_attention_forward.1} parent=0
    #allocation2 [shape = 'u8[1024]{0}', space=vmem, size = 0x400, scoped, tag = 'output window, operand 0']
    #allocation3 [shape = 's32[2]{0}', space=sflag, size = 0x8, scoped, tag = 'scoped memory for sccnn_attention_forward.1']
    %23 = vsyncpa [#allocation3], 0
    %s24 = scalar_lea.sflag [#allocation3], 1
    %25 = vsyncpa %s24, 0
    loop: start=0, step=1, limit=4
    $region2: #{sccnn_attention_forward.1} parent=1 // loop_pre_header
      _
    $region3: #{sccnn_attention_forward.1} parent=1 // loop_header
      %s27 = sphi 0, %s31
      %p28 = scmp.ge.s32.totalorder %s27, 4
      %s37 = sphi 0, %s39
      %s40 = sphi 0, %s37
      %s41 = sphi 0, %s40
      %s57 = sphi 0, %s41
      %s61 = sphi 0, %s61
      %s63 = sphi 0, %s61
      %s64 = sphi 0, %s63
      %s78 = sphi 0, %s64
      %s82 = sphi 0, %s82
      %s84 = sphi 0, %s82
      %s85 = sphi 0, %s84
      %s99 = sphi 0, %s85
      %s103 = sphi 0, %s103
      %s105 = sphi 0, %s103
      %s106 = sphi 0, %s105
      %s120 = sphi 0, %s106
      %s124 = sphi 0, %s124
      %s126 = sphi 0, %s124
      %s127 = sphi 0, %s126
      %s141 = sphi 0, %s127
      %s145 = sphi 0, %s145
      %s147 = sphi 0, %s145
      %s148 = sphi 0, %s147
      %s162 = sphi 0, %s148
      %s166 = sphi 0, %s166
      %s168 = sphi 0, %s166
      %s169 = sphi 0, %s168
      %s183 = sphi 0, %s169
      %s187 = sphi 0, %s187
      %s189 = sphi 0, %s187
      %s190 = sphi 0, %s189
      %s204 = sphi 0, %s190
      %s208 = sphi 0, %s208
      %s210 = sphi 0, %s208
      %s211 = sphi 0, %s210
      %s225 = sphi 0, %s211
      %s229 = sphi 0, %s229
      %s231 = sphi 0, %s229
      %s232 = sphi 0, %s231
      %s246 = sphi 0, %s232
      %s250 = sphi 0, %s250
      %s252 = sphi 0, %s250
      %s253 = sphi 0, %s252
      %s267 = sphi 0, %s253
      %s271 = sphi 0, %s271
      %s273 = sphi 0, %s271
      %s274 = sphi 0, %s273
      %s288 = sphi 0, %s274
      %s292 = sphi 0, %s292
      %s294 = sphi 0, %s292
      %s295 = sphi 0, %s294
      %s309 = sphi 0, %s295
      %s313 = sphi 0, %s313
      %s315 = sphi 0, %s313
      %s316 = sphi 0, %s315
      %s330 = sphi 0, %s316
      %s334 = sphi 0, %s334
      %s336 = sphi 0, %s334
      %s337 = sphi 0, %s336
      %s351 = sphi 0, %s337
      %s355 = sphi 0, %s355
      %s357 = sphi 0, %s355
      %s358 = sphi 0, %s357
      %s372 = sphi 0, %s358
      %s376 = sphi 0, %s376
      %s378 = sphi 0, %s376
      %s379 = sphi 0, %s378
      %s393 = sphi 0, %s379
      %s397 = sphi 0, %s397
      %s399 = sphi 0, %s397
      %s400 = sphi 0, %s399
      %s414 = sphi 0, %s400
      %s420 = sphi 0, %s422
      %s423 = sphi 0, %s420
      %s424 = sphi 0, %s423
      %s440 = sphi 0, %s424
    $region4: #{sccnn_attention_forward.1} parent=1 // loop_header_branch
      %30 = sbr.rel (%p28) target = $region8
    $region5: #{sccnn_attention_forward.1} parent=1 // loop_body
      %s32 = ssub.s32 %s27, 1
      %s33 = ssub.s32 %s27, 2
      %s34 = sadd.s32 %s27, 1
      %s35 = ssub.s32 %s27, %s34
      %p36 = scmp.eq.s32.totalorder %s35, 0
      %s38 = sadd.s32 %s37, 1
      %s39 = scalar_select %p36, %s37, %s38
      %p42 = pneg %p36
      %p43 = scmp.eq.s32.totalorder %s27, 1
      %p44 = por %p42, %p43
      %p45 = scmp.ne.s32.totalorder %s37, %s40
      %p46 = scmp.eq.s32.totalorder %s27, 0
      %p47 = por %p45, %p46
      %p48 = scmp.ne.s32.totalorder %s37, %s40
      %p49 = scmp.eq.s32.totalorder %s32, 1
      %p50 = por %p48, %p49
      %p51 = scmp.ne.s32.totalorder %s40, %s41
      %p52 = scmp.eq.s32.totalorder %s32, 0
      %p53 = por %p51, %p52
      %p54 = scmp.ne.s32.totalorder %s40, %s41
      %p55 = scmp.eq.s32.totalorder %s33, 1
      %p56 = por %p54, %p55
      %p58 = scmp.ne.s32.totalorder %s41, %s57
      %p59 = scmp.eq.s32.totalorder %s33, 0
      %p60 = por %p58, %p59
      %s62 = sadd.s32 %s61, 1
      %p65 = scmp.eq.s32.totalorder %s27, 1
      %p66 = scmp.ne.s32.totalorder %s61, %s63
      %p67 = scmp.eq.s32.totalorder %s27, 0
      %p68 = por %p66, %p67
      %p69 = scmp.ne.s32.totalorder %s61, %s63
      %p70 = scmp.eq.s32.totalorder %s32, 1
      %p71 = por %p69, %p70
      %p72 = scmp.ne.s32.totalorder %s63, %s64
      %p73 = scmp.eq.s32.totalorder %s32, 0
      %p74 = por %p72, %p73
      %p75 = scmp.ne.s32.totalorder %s63, %s64
      %p76 = scmp.eq.s32.totalorder %s33, 1
      %p77 = por %p75, %p76
      %p79 = scmp.ne.s32.totalorder %s64, %s78
      %p80 = scmp.eq.s32.totalorder %s33, 0
      %p81 = por %p79, %p80
      %s83 = sadd.s32 %s82, 1
      %p86 = scmp.eq.s32.totalorder %s27, 1
      %p87 = scmp.ne.s32.totalorder %s82, %s84
      %p88 = scmp.eq.s32.totalorder %s27, 0
      %p89 = por %p87, %p88
      %p90 = scmp.ne.s32.totalorder %s82, %s84
      %p91 = scmp.eq.s32.totalorder %s32, 1
      %p92 = por %p90, %p91
      %p93 = scmp.ne.s32.totalorder %s84, %s85
      %p94 = scmp.eq.s32.totalorder %s32, 0
      %p95 = por %p93, %p94
      %p96 = scmp.ne.s32.totalorder %s84, %s85
      %p97 = scmp.eq.s32.totalorder %s33, 1
      %p98 = por %p96, %p97
      %p100 = scmp.ne.s32.totalorder %s85, %s99
      %p101 = scmp.eq.s32.totalorder %s33, 0
      %p102 = por %p100, %p101
      %s104 = sadd.s32 %s103, 1
      %p107 = scmp.eq.s32.totalorder %s27, 1
      %p108 = scmp.ne.s32.totalorder %s103, %s105
      %p109 = scmp.eq.s32.totalorder %s27, 0
      %p110 = por %p108, %p109
      %p111 = scmp.ne.s32.totalorder %s103, %s105
      %p112 = scmp.eq.s32.totalorder %s32, 1
      %p113 = por %p111, %p112
      %p114 = scmp.ne.s32.totalorder %s105, %s106
      %p115 = scmp.eq.s32.totalorder %s32, 0
      %p116 = por %p114, %p115
      %p117 = scmp.ne.s32.totalorder %s105, %s106
      %p118 = scmp.eq.s32.totalorder %s33, 1
      %p119 = por %p117, %p118
      %p121 = scmp.ne.s32.totalorder %s106, %s120
      %p122 = scmp.eq.s32.totalorder %s33, 0
      %p123 = por %p121, %p122
      %s125 = sadd.s32 %s124, 1
      %p128 = scmp.eq.s32.totalorder %s27, 1
      %p129 = scmp.ne.s32.totalorder %s124, %s126
      %p130 = scmp.eq.s32.totalorder %s27, 0
      %p131 = por %p129, %p130
      %p132 = scmp.ne.s32.totalorder %s124, %s126
      %p133 = scmp.eq.s32.totalorder %s32, 1
      %p134 = por %p132, %p133
      %p135 = scmp.ne.s32.totalorder %s126, %s127
      %p136 = scmp.eq.s32.totalorder %s32, 0
      %p137 = por %p135, %p136
      %p138 = scmp.ne.s32.totalorder %s126, %s127
      %p139 = scmp.eq.s32.totalorder %s33, 1
      %p140 = por %p138, %p139
      %p142 = scmp.ne.s32.totalorder %s127, %s141
      %p143 = scmp.eq.s32.totalorder %s33, 0
      %p144 = por %p142, %p143
      %s146 = sadd.s32 %s145, 1
      %p149 = scmp.eq.s32.totalorder %s27, 1
      %p150 = scmp.ne.s32.totalorder %s145, %s147
      %p151 = scmp.eq.s32.totalorder %s27, 0
      %p152 = por %p150, %p151
      %p153 = scmp.ne.s32.totalorder %s145, %s147
      %p154 = scmp.eq.s32.totalorder %s32, 1
      %p155 = por %p153, %p154
      %p156 = scmp.ne.s32.totalorder %s147, %s148
      %p157 = scmp.eq.s32.totalorder %s32, 0
      %p158 = por %p156, %p157
      %p159 = scmp.ne.s32.totalorder %s147, %s148
      %p160 = scmp.eq.s32.totalorder %s33, 1
      %p161 = por %p159, %p160
      %p163 = scmp.ne.s32.totalorder %s148, %s162
      %p164 = scmp.eq.s32.totalorder %s33, 0
      %p165 = por %p163, %p164
      %s167 = sadd.s32 %s166, 1
      %p170 = scmp.eq.s32.totalorder %s27, 1
      %p171 = scmp.ne.s32.totalorder %s166, %s168
      %p172 = scmp.eq.s32.totalorder %s27, 0
      %p173 = por %p171, %p172
      %p174 = scmp.ne.s32.totalorder %s166, %s168
      %p175 = scmp.eq.s32.totalorder %s32, 1
      %p176 = por %p174, %p175
      %p177 = scmp.ne.s32.totalorder %s168, %s169
      %p178 = scmp.eq.s32.totalorder %s32, 0
      %p179 = por %p177, %p178
      %p180 = scmp.ne.s32.totalorder %s168, %s169
      %p181 = scmp.eq.s32.totalorder %s33, 1
      %p182 = por %p180, %p181
      %p184 = scmp.ne.s32.totalorder %s169, %s183
      %p185 = scmp.eq.s32.totalorder %s33, 0
      %p186 = por %p184, %p185
      %s188 = sadd.s32 %s187, 1
      %p191 = scmp.eq.s32.totalorder %s27, 1
      %p192 = scmp.ne.s32.totalorder %s187, %s189
      %p193 = scmp.eq.s32.totalorder %s27, 0
      %p194 = por %p192, %p193
      %p195 = scmp.ne.s32.totalorder %s187, %s189
      %p196 = scmp.eq.s32.totalorder %s32, 1
      %p197 = por %p195, %p196
      %p198 = scmp.ne.s32.totalorder %s189, %s190
      %p199 = scmp.eq.s32.totalorder %s32, 0
      %p200 = por %p198, %p199
      %p201 = scmp.ne.s32.totalorder %s189, %s190
      %p202 = scmp.eq.s32.totalorder %s33, 1
      %p203 = por %p201, %p202
      %p205 = scmp.ne.s32.totalorder %s190, %s204
      %p206 = scmp.eq.s32.totalorder %s33, 0
      %p207 = por %p205, %p206
      %s209 = sadd.s32 %s208, 1
      %p212 = scmp.eq.s32.totalorder %s27, 1
      %p213 = scmp.ne.s32.totalorder %s208, %s210
      %p214 = scmp.eq.s32.totalorder %s27, 0
      %p215 = por %p213, %p214
      %p216 = scmp.ne.s32.totalorder %s208, %s210
      %p217 = scmp.eq.s32.totalorder %s32, 1
      %p218 = por %p216, %p217
      %p219 = scmp.ne.s32.totalorder %s210, %s211
      %p220 = scmp.eq.s32.totalorder %s32, 0
      %p221 = por %p219, %p220
      %p222 = scmp.ne.s32.totalorder %s210, %s211
      %p223 = scmp.eq.s32.totalorder %s33, 1
      %p224 = por %p222, %p223
      %p226 = scmp.ne.s32.totalorder %s211, %s225
      %p227 = scmp.eq.s32.totalorder %s33, 0
      %p228 = por %p226, %p227
      %s230 = sadd.s32 %s229, 1
      %p233 = scmp.eq.s32.totalorder %s27, 1
      %p234 = scmp.ne.s32.totalorder %s229, %s231
      %p235 = scmp.eq.s32.totalorder %s27, 0
      %p236 = por %p234, %p235
      %p237 = scmp.ne.s32.totalorder %s229, %s231
      %p238 = scmp.eq.s32.totalorder %s32, 1
      %p239 = por %p237, %p238
      %p240 = scmp.ne.s32.totalorder %s231, %s232
      %p241 = scmp.eq.s32.totalorder %s32, 0
      %p242 = por %p240, %p241
      %p243 = scmp.ne.s32.totalorder %s231, %s232
      %p244 = scmp.eq.s32.totalorder %s33, 1
      %p245 = por %p243, %p244
      %p247 = scmp.ne.s32.totalorder %s232, %s246
      %p248 = scmp.eq.s32.totalorder %s33, 0
      %p249 = por %p247, %p248
      %s251 = sadd.s32 %s250, 1
      %p254 = scmp.eq.s32.totalorder %s27, 1
      %p255 = scmp.ne.s32.totalorder %s250, %s252
      %p256 = scmp.eq.s32.totalorder %s27, 0
      %p257 = por %p255, %p256
      %p258 = scmp.ne.s32.totalorder %s250, %s252
      %p259 = scmp.eq.s32.totalorder %s32, 1
      %p260 = por %p258, %p259
      %p261 = scmp.ne.s32.totalorder %s252, %s253
      %p262 = scmp.eq.s32.totalorder %s32, 0
      %p263 = por %p261, %p262
      %p264 = scmp.ne.s32.totalorder %s252, %s253
      %p265 = scmp.eq.s32.totalorder %s33, 1
      %p266 = por %p264, %p265
      %p268 = scmp.ne.s32.totalorder %s253, %s267
      %p269 = scmp.eq.s32.totalorder %s33, 0
      %p270 = por %p268, %p269
      %s272 = sadd.s32 %s271, 1
      %p275 = scmp.eq.s32.totalorder %s27, 1
      %p276 = scmp.ne.s32.totalorder %s271, %s273
      %p277 = scmp.eq.s32.totalorder %s27, 0
      %p278 = por %p276, %p277
      %p279 = scmp.ne.s32.totalorder %s271, %s273
      %p280 = scmp.eq.s32.totalorder %s32, 1
      %p281 = por %p279, %p280
      %p282 = scmp.ne.s32.totalorder %s273, %s274
      %p283 = scmp.eq.s32.totalorder %s32, 0
      %p284 = por %p282, %p283
      %p285 = scmp.ne.s32.totalorder %s273, %s274
      %p286 = scmp.eq.s32.totalorder %s33, 1
      %p287 = por %p285, %p286
      %p289 = scmp.ne.s32.totalorder %s274, %s288
      %p290 = scmp.eq.s32.totalorder %s33, 0
      %p291 = por %p289, %p290
      %s293 = sadd.s32 %s292, 1
      %p296 = scmp.eq.s32.totalorder %s27, 1
      %p297 = scmp.ne.s32.totalorder %s292, %s294
      %p298 = scmp.eq.s32.totalorder %s27, 0
      %p299 = por %p297, %p298
      %p300 = scmp.ne.s32.totalorder %s292, %s294
      %p301 = scmp.eq.s32.totalorder %s32, 1
      %p302 = por %p300, %p301
      %p303 = scmp.ne.s32.totalorder %s294, %s295
      %p304 = scmp.eq.s32.totalorder %s32, 0
      %p305 = por %p303, %p304
      %p306 = scmp.ne.s32.totalorder %s294, %s295
      %p307 = scmp.eq.s32.totalorder %s33, 1
      %p308 = por %p306, %p307
      %p310 = scmp.ne.s32.totalorder %s295, %s309
      %p311 = scmp.eq.s32.totalorder %s33, 0
      %p312 = por %p310, %p311
      %s314 = sadd.s32 %s313, 1
      %p317 = scmp.eq.s32.totalorder %s27, 1
      %p318 = scmp.ne.s32.totalorder %s313, %s315
      %p319 = scmp.eq.s32.totalorder %s27, 0
      %p320 = por %p318, %p319
      %p321 = scmp.ne.s32.totalorder %s313, %s315
      %p322 = scmp.eq.s32.totalorder %s32, 1
      %p323 = por %p321, %p322
      %p324 = scmp.ne.s32.totalorder %s315, %s316
      %p325 = scmp.eq.s32.totalorder %s32, 0
      %p326 = por %p324, %p325
      %p327 = scmp.ne.s32.totalorder %s315, %s316
      %p328 = scmp.eq.s32.totalorder %s33, 1
      %p329 = por %p327, %p328
      %p331 = scmp.ne.s32.totalorder %s316, %s330
      %p332 = scmp.eq.s32.totalorder %s33, 0
      %p333 = por %p331, %p332
      %s335 = sadd.s32 %s334, 1
      %p338 = scmp.eq.s32.totalorder %s27, 1
      %p339 = scmp.ne.s32.totalorder %s334, %s336
      %p340 = scmp.eq.s32.totalorder %s27, 0
      %p341 = por %p339, %p340
      %p342 = scmp.ne.s32.totalorder %s334, %s336
      %p343 = scmp.eq.s32.totalorder %s32, 1
      %p344 = por %p342, %p343
      %p345 = scmp.ne.s32.totalorder %s336, %s337
      %p346 = scmp.eq.s32.totalorder %s32, 0
      %p347 = por %p345, %p346
      %p348 = scmp.ne.s32.totalorder %s336, %s337
      %p349 = scmp.eq.s32.totalorder %s33, 1
      %p350 = por %p348, %p349
      %p352 = scmp.ne.s32.totalorder %s337, %s351
      %p353 = scmp.eq.s32.totalorder %s33, 0
      %p354 = por %p352, %p353
      %s356 = sadd.s32 %s355, 1
      %p359 = scmp.eq.s32.totalorder %s27, 1
      %p360 = scmp.ne.s32.totalorder %s355, %s357
      %p361 = scmp.eq.s32.totalorder %s27, 0
      %p362 = por %p360, %p361
      %p363 = scmp.ne.s32.totalorder %s355, %s357
      %p364 = scmp.eq.s32.totalorder %s32, 1
      %p365 = por %p363, %p364
      %p366 = scmp.ne.s32.totalorder %s357, %s358
      %p367 = scmp.eq.s32.totalorder %s32, 0
      %p368 = por %p366, %p367
      %p369 = scmp.ne.s32.totalorder %s357, %s358
      %p370 = scmp.eq.s32.totalorder %s33, 1
      %p371 = por %p369, %p370
      %p373 = scmp.ne.s32.totalorder %s358, %s372
      %p374 = scmp.eq.s32.totalorder %s33, 0
      %p375 = por %p373, %p374
      %s377 = sadd.s32 %s376, 1
      %p380 = scmp.eq.s32.totalorder %s27, 1
      %p381 = scmp.ne.s32.totalorder %s376, %s378
      %p382 = scmp.eq.s32.totalorder %s27, 0
      %p383 = por %p381, %p382
      %p384 = scmp.ne.s32.totalorder %s376, %s378
      %p385 = scmp.eq.s32.totalorder %s32, 1
      %p386 = por %p384, %p385
      %p387 = scmp.ne.s32.totalorder %s378, %s379
      %p388 = scmp.eq.s32.totalorder %s32, 0
      %p389 = por %p387, %p388
      %p390 = scmp.ne.s32.totalorder %s378, %s379
      %p391 = scmp.eq.s32.totalorder %s33, 1
      %p392 = por %p390, %p391
      %p394 = scmp.ne.s32.totalorder %s379, %s393
      %p395 = scmp.eq.s32.totalorder %s33, 0
      %p396 = por %p394, %p395
      %s398 = sadd.s32 %s397, 1
      %p401 = scmp.eq.s32.totalorder %s27, 1
      %p402 = scmp.ne.s32.totalorder %s397, %s399
      %p403 = scmp.eq.s32.totalorder %s27, 0
      %p404 = por %p402, %p403
      %p405 = scmp.ne.s32.totalorder %s397, %s399
      %p406 = scmp.eq.s32.totalorder %s32, 1
      %p407 = por %p405, %p406
      %p408 = scmp.ne.s32.totalorder %s399, %s400
      %p409 = scmp.eq.s32.totalorder %s32, 0
      %p410 = por %p408, %p409
      %p411 = scmp.ne.s32.totalorder %s399, %s400
      %p412 = scmp.eq.s32.totalorder %s33, 1
      %p413 = por %p411, %p412
      %p415 = scmp.ne.s32.totalorder %s400, %s414
      %p416 = scmp.eq.s32.totalorder %s33, 0
      %p417 = por %p415, %p416
      %s418 = ssub.s32 %s27, %s34
      %p419 = scmp.eq.s32.totalorder %s418, 0
      %s421 = sadd.s32 %s420, 1
      %s422 = scalar_select %p419, %s420, %s421
      %p425 = pneg %p419
      %p426 = scmp.eq.s32.totalorder %s27, 1
      %p427 = por %p425, %p426
      %p428 = scmp.ne.s32.totalorder %s420, %s423
      %p429 = scmp.eq.s32.totalorder %s27, 0
      %p430 = por %p428, %p429
      %p431 = scmp.ne.s32.totalorder %s420, %s423
      %p432 = scmp.eq.s32.totalorder %s32, 1
      %p433 = por %p431, %p432
      %p434 = scmp.ne.s32.totalorder %s423, %s424
      %p435 = scmp.eq.s32.totalorder %s32, 0
      %p436 = por %p434, %p435
      %p437 = scmp.ne.s32.totalorder %s423, %s424
      %p438 = scmp.eq.s32.totalorder %s33, 1
      %p439 = por %p437, %p438
      %p441 = scmp.ne.s32.totalorder %s424, %s440
      %p442 = scmp.eq.s32.totalorder %s33, 0
      %p443 = por %p441, %p442
      %p444 = scmp.le.s32.totalorder 1, %s27
      %p445 = scmp.lt.s32.totalorder %s27, 3
      %p446 = pnand %p444, %p445
      %p447 = pneg %p446
      // Predicated region
      $region9: #{sccnn_attention_forward.1} parent=5 // pred_check
        _
      $region10: #{sccnn_attention_forward.1} parent=5 // pred_check_branch
        %449 = sbr.rel (%p446) target = $region12
      $region11: #{sccnn_attention_forward.1} parent=5 // pred_region
        %s450 = ssub.s32 %s27, 1
        // Predicated region
        $region13: #{sccnn_attention_forward.1} parent=11 // pred_check
          %p451 = pneg %p74
        $region14: #{sccnn_attention_forward.1} parent=11 // pred_check_branch
          %453 = sbr.rel (%p451) target = $region16
        $region15: #{sccnn_attention_forward.1} parent=11 // pred_region
          _
        $region16: #{sccnn_attention_forward.1} parent=11 // pred_fallthru
          _
        // Predicated region
        $region17: #{sccnn_attention_forward.1} parent=11 // pred_check
          %p454 = pneg %p95
        $region18: #{sccnn_attention_forward.1} parent=11 // pred_check_branch
          %456 = sbr.rel (%p454) target = $region20
        $region19: #{sccnn_attention_forward.1} parent=11 // pred_region
          _
        $region20: #{sccnn_attention_forward.1} parent=11 // pred_fallthru
          _
        // Predicated region
        $region21: #{sccnn_attention_forward.1} parent=11 // pred_check
          %p457 = pneg %p116
        $region22: #{sccnn_attention_forward.1} parent=11 // pred_check_branch
          %459 = sbr.rel (%p457) target = $region24
        $region23: #{sccnn_attention_forward.1} parent=11 // pred_region
          _
        $region24: #{sccnn_attention_forward.1} parent=11 // pred_fallthru
          _
        // Predicated region
        $region25: #{sccnn_attention_forward.1} parent=11 // pred_check
          %p460 = pneg %p137
        $region26: #{sccnn_attention_forward.1} parent=11 // pred_check_branch
          %462 = sbr.rel (%p460) target = $region28
        $region27: #{sccnn_attention_forward.1} parent=11 // pred_region
          _
        $region28: #{sccnn_attention_forward.1} parent=11 // pred_fallthru
          _
        // Predicated region
        $region29: #{sccnn_attention_forward.1} parent=11 // pred_check
          %p463 = pneg %p158
        $region30: #{sccnn_attention_forward.1} parent=11 // pred_check_branch
          %465 = sbr.rel (%p463) target = $region32
        $region31: #{sccnn_attention_forward.1} parent=11 // pred_region
          _
        $region32: #{sccnn_attention_forward.1} parent=11 // pred_fallthru
          _
        // Predicated region
        $region33: #{sccnn_attention_forward.1} parent=11 // pred_check
          %p466 = pneg %p179
        $region34: #{sccnn_attention_forward.1} parent=11 // pred_check_branch
          %468 = sbr.rel (%p466) target = $region36
        $region35: #{sccnn_attention_forward.1} parent=11 // pred_region
          _
        $region36: #{sccnn_attention_forward.1} parent=11 // pred_fallthru
          _
        // Predicated region
        $region37: #{sccnn_attention_forward.1} parent=11 // pred_check
          %p469 = pneg %p200
        $region38: #{sccnn_attention_forward.1} parent=11 // pred_check_branch
          %471 = sbr.rel (%p469) target = $region40
        $region39: #{sccnn_attention_forward.1} parent=11 // pred_region
          _
        $region40: #{sccnn_attention_forward.1} parent=11 // pred_fallthru
          _
        // Predicated region
        $region41: #{sccnn_attention_forward.1} parent=11 // pred_check
          %p472 = pneg %p221
        $region42: #{sccnn_attention_forward.1} parent=11 // pred_check_branch
          %474 = sbr.rel (%p472) target = $region44
        $region43: #{sccnn_attention_forward.1} parent=11 // pred_region
          _
        $region44: #{sccnn_attention_forward.1} parent=11 // pred_fallthru
          _
        // Predicated region
        $region45: #{sccnn_attention_forward.1} parent=11 // pred_check
          %p475 = pneg %p242
        $region46: #{sccnn_attention_forward.1} parent=11 // pred_check_branch
          %477 = sbr.rel (%p475) target = $region48
        $region47: #{sccnn_attention_forward.1} parent=11 // pred_region
          _
        $region48: #{sccnn_attention_forward.1} parent=11 // pred_fallthru
          _
        // Predicated region
        $region49: #{sccnn_attention_forward.1} parent=11 // pred_check
          %p478 = pneg %p263
        $region50: #{sccnn_attention_forward.1} parent=11 // pred_check_branch
          %480 = sbr.rel (%p478) target = $region52
        $region51: #{sccnn_attention_forward.1} parent=11 // pred_region
          _
        $region52: #{sccnn_attention_forward.1} parent=11 // pred_fallthru
          _
        // Predicated region
        $region53: #{sccnn_attention_forward.1} parent=11 // pred_check
          %p481 = pneg %p284
        $region54: #{sccnn_attention_forward.1} parent=11 // pred_check_branch
          %483 = sbr.rel (%p481) target = $region56
        $region55: #{sccnn_attention_forward.1} parent=11 // pred_region
          _
        $region56: #{sccnn_attention_forward.1} parent=11 // pred_fallthru
          _
        // Predicated region
        $region57: #{sccnn_attention_forward.1} parent=11 // pred_check
          %p484 = pneg %p305
        $region58: #{sccnn_attention_forward.1} parent=11 // pred_check_branch
          %486 = sbr.rel (%p484) target = $region60
        $region59: #{sccnn_attention_forward.1} parent=11 // pred_region
          _
        $region60: #{sccnn_attention_forward.1} parent=11 // pred_fallthru
          _
        // Predicated region
        $region61: #{sccnn_attention_forward.1} parent=11 // pred_check
          %p487 = pneg %p326
        $region62: #{sccnn_attention_forward.1} parent=11 // pred_check_branch
          %489 = sbr.rel (%p487) target = $region64
        $region63: #{sccnn_attention_forward.1} parent=11 // pred_region
          _
        $region64: #{sccnn_attention_forward.1} parent=11 // pred_fallthru
          _
        // Predicated region
        $region65: #{sccnn_attention_forward.1} parent=11 // pred_check
          %p490 = pneg %p347
        $region66: #{sccnn_attention_forward.1} parent=11 // pred_check_branch
          %492 = sbr.rel (%p490) target = $region68
        $region67: #{sccnn_attention_forward.1} parent=11 // pred_region
          _
        $region68: #{sccnn_attention_forward.1} parent=11 // pred_fallthru
          _
        // Predicated region
        $region69: #{sccnn_attention_forward.1} parent=11 // pred_check
          %p493 = pneg %p368
        $region70: #{sccnn_attention_forward.1} parent=11 // pred_check_branch
          %495 = sbr.rel (%p493) target = $region72
        $region71: #{sccnn_attention_forward.1} parent=11 // pred_region
          _
        $region72: #{sccnn_attention_forward.1} parent=11 // pred_fallthru
          _
        // Predicated region
        $region73: #{sccnn_attention_forward.1} parent=11 // pred_check
          %p496 = pneg %p389
        $region74: #{sccnn_attention_forward.1} parent=11 // pred_check_branch
          %498 = sbr.rel (%p496) target = $region76
        $region75: #{sccnn_attention_forward.1} parent=11 // pred_region
          _
        $region76: #{sccnn_attention_forward.1} parent=11 // pred_fallthru
          _
        // Predicated region
        $region77: #{sccnn_attention_forward.1} parent=11 // pred_check
          %p499 = pneg %p410
        $region78: #{sccnn_attention_forward.1} parent=11 // pred_check_branch
          %501 = sbr.rel (%p499) target = $region80
        $region79: #{sccnn_attention_forward.1} parent=11 // pred_region
          _
        $region80: #{sccnn_attention_forward.1} parent=11 // pred_fallthru
          _
      $region12: #{sccnn_attention_forward.1} parent=5 // pred_fallthru
        _
      %p502 = scmp.lt.s32.totalorder %s27, 2
      // Predicated region
      $region81: #{sccnn_attention_forward.1} parent=5 // pred_check
        %p503 = pneg %p502
      $region82: #{sccnn_attention_forward.1} parent=5 // pred_check_branch
        %505 = sbr.rel (%p503) target = $region84
      $region83: #{sccnn_attention_forward.1} parent=5 // pred_region
        // Predicated region
        $region85: #{sccnn_attention_forward.1} parent=83 // pred_check
          %p506 = pneg %p47
        $region86: #{sccnn_attention_forward.1} parent=83 // pred_check_branch
          %508 = sbr.rel (%p506) target = $region88
        $region87: #{sccnn_attention_forward.1} parent=83 // pred_region
          %p509 = scmp.lt.s32.totalorder %s27, 1
          %s510 = scalar_select %p509, %s27, 1
          %s511 = smul.addr %s510, 4
          %s512 = scalar_lea.vmem %s0, %s511
        $region88: #{sccnn_attention_forward.1} parent=83 // pred_fallthru
          _
      $region84: #{sccnn_attention_forward.1} parent=5 // pred_fallthru
        _
      %p513 = scmp.le.s32.totalorder 1, %s27
      %p514 = scmp.lt.s32.totalorder %s27, 3
      %p515 = pnand %p513, %p514
      %p516 = pneg %p515
      // Predicated region
      $region89: #{sccnn_attention_forward.1} parent=5 // pred_check
        _
      $region90: #{sccnn_attention_forward.1} parent=5 // pred_check_branch
        %518 = sbr.rel (%p515) target = $region92
      $region91: #{sccnn_attention_forward.1} parent=5 // pred_region
        %s519 = ssub.s32 %s27, 1
        %p520 = scmp.lt.s32.totalorder %s32, 1
        %s521 = scalar_select %p520, %s32, 1
        %s522 = smul.addr %s521, 4
        %s523 = scalar_lea.vmem %s0, %s522
        %p524 = pneg %p53
        %p525 = pneg %p50
        %p526 = pneg %p74
        %p527 = pneg %p71
        %p528 = pneg %p95
        %p529 = pneg %p92
        %p530 = pneg %p116
        %p531 = pneg %p113
        %p532 = pneg %p137
        %p533 = pneg %p134
        %p534 = pneg %p158
        %p535 = pneg %p155
        %p536 = pneg %p179
        %p537 = pneg %p176
        %p538 = pneg %p200
        %p539 = pneg %p197
        %p540 = pneg %p221
        %p541 = pneg %p218
        %p542 = pneg %p242
        %p543 = pneg %p239
        %p544 = pneg %p263
        %p545 = pneg %p260
        %p546 = pneg %p284
        %p547 = pneg %p281
        %p548 = pneg %p305
        %p549 = pneg %p302
        %p550 = pneg %p326
        %p551 = pneg %p323
        %p552 = pneg %p347
        %p553 = pneg %p344
        %p554 = pneg %p368
        %p555 = pneg %p365
        %p556 = pneg %p389
        %p557 = pneg %p386
        %p558 = pneg %p410
        %p559 = pneg %p407
        %p560 = pneg %p436
        %p561 = pneg %p433
        %s562 = sand.u32 %s423, 1
        %s563 = scalar_lea.sflag [#allocation3], %s562
        %s564 = sand.u32 %s423, 1
        %s565 = scalar_lea.vmem [#allocation2], %s564
        %p566 = scmp.lt.s32.totalorder %s32, 1
        %s567 = scalar_select %p566, %s32, 1
        %s568 = smul.addr %s567, 4
        %s569 = scalar_lea.vmem %s0, %s568
        %v571 = vld [vmem:[%s1] sm:$0xf]
        %v572 = vld [vmem:[%s569] sm:$0xf]
        %vm573 = vcmp.eq.s32.totalorder %v571, 0
        %v575 = vlaneseq
        %v576 = vshrl.u32 %v575, 7
        %v577 = vsub.s32 0, %v576
        %v578 = vrot.slane %v572, %v577
        %v579 = vlaneseq
        %v580 = vshrl.u32 %v579, 7
        %v581 = vsub.s32 1, %v580
        %v582 = vrot.slane %v572, %v581
        %v583 = vlaneseq
        %v584 = vshrl.u32 %v583, 7
        %v585 = vsub.s32 2, %v584
        %v586 = vrot.slane %v572, %v585
        %v587 = vlaneseq
        %v588 = vshrl.u32 %v587, 7
        %v589 = vsub.s32 3, %v588
        %v590 = vrot.slane %v572, %v589
        %595 = vrot.lane.b32.xlu0 %v578, 1
        %v596 = vpop.permute.xlu0 %595
        %597 = vrot.lane.b32.xlu0 %v582, 1
        %v598 = vpop.permute.xlu0 %597
        %599 = vrot.lane.b32.xlu0 %v586, 1
        %v600 = vpop.permute.xlu0 %599
        %601 = vrot.lane.b32.xlu0 %v590, 1
        %v602 = vpop.permute.xlu0 %601
        %v603 = vlaneseq
        %v604 = vand.u32 %v603, 127
        %vm605 = vcmp.lt.s32.totalorder %v604, 1
        %v606 = vsel %vm605, %v600, %v602
        %v607 = vsel %vm605, %v598, %v600
        %v608 = vsel %vm605, %v596, %v598
        %v609 = vsel %vm605, %v602, %v596
        %v614 = vcombine.low %v609, %v608
        %v615 = vcombine.low %v607, %v606
        %v617 = vunpack.c.l.s4 1966171168
        %v618 = vunpack.c.0.s8 %v617
        %v619 = vlaneseq
        %v620 = vshrl.u32 %v619, 7
        %v621 = vsub.s32 %v618, %v620
        %v622 = vrot.slane %v614, %v621
        %v624 = vunpack.c.l.s4 1966171168
        %v625 = vunpack.c.0.s8 %v624
        %v626 = vlaneseq
        %v627 = vshrl.u32 %v626, 7
        %v628 = vsub.s32 %v625, %v627
        %v629 = vrot.slane %v615, %v628
        %v630 = vcombine.low %v622, %v629
        %v632 = vunpack.c.l.s4 1966171168
        %v633 = vunpack.c.0.s8 %v632
        %v634 = vlaneseq
        %v635 = vshrl.u32 %v634, 7
        %v636 = vsub.s32 %v633, %v635
        %v637 = vrot.slane %v630, %v636
        %v639 = vsel %vm573, 0.0, %v637
        %vm640 = vcmp.eq.s32.totalorder %v571, 127
        %641 = vrot.lane.b32.xlu0 %v578, 127
        %v642 = vpop.permute.xlu0 %641
        %643 = vrot.lane.b32.xlu0 %v582, 127
        %v644 = vpop.permute.xlu0 %643
        %645 = vrot.lane.b32.xlu0 %v586, 127
        %v646 = vpop.permute.xlu0 %645
        %647 = vrot.lane.b32.xlu0 %v590, 127
        %v648 = vpop.permute.xlu0 %647
        %vm649 = vcmp.lt.s32.totalorder %v604, 127
        %v650 = vsel %vm649, %v646, %v648
        %v651 = vsel %vm649, %v644, %v646
        %v652 = vsel %vm649, %v642, %v644
        %v653 = vsel %vm649, %v648, %v642
        %v658 = vcombine.low %v652, %v651
        %v659 = vcombine.low %v650, %v653
        %v661 = vunpack.c.l.s4 1966171168
        %v662 = vunpack.c.0.s8 %v661
        %v663 = vlaneseq
        %v664 = vshrl.u32 %v663, 7
        %v665 = vsub.s32 %v662, %v664
        %v666 = vrot.slane %v658, %v665
        %v668 = vunpack.c.l.s4 1966171168
        %v669 = vunpack.c.0.s8 %v668
        %v670 = vlaneseq
        %v671 = vshrl.u32 %v670, 7
        %v672 = vsub.s32 %v669, %v671
        %v673 = vrot.slane %v659, %v672
        %v674 = vcombine.low %v666, %v673
        %v676 = vunpack.c.l.s4 1966171168
        %v677 = vunpack.c.0.s8 %v676
        %v678 = vlaneseq
        %v679 = vshrl.u32 %v678, 7
        %v680 = vsub.s32 %v677, %v679
        %v681 = vrot.slane %v674, %v680
        %v683 = vsel %vm640, 0.0, %v681
        %v684 = vld [vmem:[%s3] sm:$0xff]
        %686 = vset.pattern.permute.xlu0 0
        %687 = vperm.xlu0 %686, %v684
        %v688 = vpop.permute.xlu0 %687
        %v691 = vlaneseq
        %v692 = vshrl.u32 %v691, 7
        %v693 = vsub.s32 0, %v692
        %v694 = vrot.slane %v639, %v693
        %v695 = vlaneseq
        %v696 = vshrl.u32 %v695, 7
        %v697 = vsub.s32 1, %v696
        %v698 = vrot.slane %v639, %v697
        %v699 = vlaneseq
        %v700 = vshrl.u32 %v699, 7
        %v701 = vsub.s32 2, %v700
        %v702 = vrot.slane %v639, %v701
        %v703 = vlaneseq
        %v704 = vshrl.u32 %v703, 7
        %v705 = vsub.s32 3, %v704
        %v706 = vrot.slane %v639, %v705
        %v711 = vmul.f32 %v688, %v694
        %v712 = vmul.f32 %v688, %v698
        %v713 = vmul.f32 %v688, %v702
        %v714 = vmul.f32 %v688, %v706
        %715 = vset.pattern.permute.xlu0 1
        %716 = vperm.xlu0 %715, %v684
        %v717 = vpop.permute.xlu0 %716
        %v719 = vmul.f32 %v717, %v578
        %v720 = vmul.f32 %v717, %v582
        %v721 = vmul.f32 %v717, %v586
        %v722 = vmul.f32 %v717, %v590
        %v723 = vadd.f32 %v711, %v719
        %v724 = vadd.f32 %v712, %v720
        %v725 = vadd.f32 %v713, %v721
        %v726 = vadd.f32 %v714, %v722
        %727 = vset.pattern.permute.xlu0 2
        %728 = vperm.xlu0 %727, %v684
        %v729 = vpop.permute.xlu0 %728
        %v732 = vlaneseq
        %v733 = vshrl.u32 %v732, 7
        %v734 = vsub.s32 0, %v733
        %v735 = vrot.slane %v683, %v734
        %v736 = vlaneseq
        %v737 = vshrl.u32 %v736, 7
        %v738 = vsub.s32 1, %v737
        %v739 = vrot.slane %v683, %v738
        %v740 = vlaneseq
        %v741 = vshrl.u32 %v740, 7
        %v742 = vsub.s32 2, %v741
        %v743 = vrot.slane %v683, %v742
        %v744 = vlaneseq
        %v745 = vshrl.u32 %v744, 7
        %v746 = vsub.s32 3, %v745
        %v747 = vrot.slane %v683, %v746
        %v752 = vmul.f32 %v729, %v735
        %v753 = vmul.f32 %v729, %v739
        %v754 = vmul.f32 %v729, %v743
        %v755 = vmul.f32 %v729, %v747
        %v756 = vadd.f32 %v723, %v752
        %v757 = vadd.f32 %v724, %v753
        %v758 = vadd.f32 %v725, %v754
        %v759 = vadd.f32 %v726, %v755
        %v760 = vld [vmem:[%s4] sm:$0xff]
        %762 = vset.pattern.permute.xlu0 0
        %763 = vperm.xlu0 %762, %v760
        %v764 = vpop.permute.xlu0 %763
        %v766 = vadd.f32 %v756, %v764
        %v767 = vadd.f32 %v757, %v764
        %v768 = vadd.f32 %v758, %v764
        %v769 = vadd.f32 %v759, %v764
        %v770 = vmax.f32 %v766, 0.0
        %v771 = vmax.f32 %v767, 0.0
        %v772 = vmax.f32 %v768, 0.0
        %v773 = vmax.f32 %v769, 0.0
        %774 = vrot.lane.b32.xlu0 %v770, 127
        %v775 = vpop.permute.xlu0 %774
        %776 = vrot.lane.b32.xlu0 %v771, 127
        %v777 = vpop.permute.xlu0 %776
        %778 = vrot.lane.b32.xlu0 %v772, 127
        %v779 = vpop.permute.xlu0 %778
        %780 = vrot.lane.b32.xlu0 %v773, 127
        %v781 = vpop.permute.xlu0 %780
        %v782 = vsel %vm649, %v779, %v781
        %v783 = vsel %vm649, %v777, %v779
        %v784 = vsel %vm649, %v775, %v777
        %v785 = vsel %vm649, %v781, %v775
        %v786 = vmax.f32 %v770, %v784
        %v787 = vmax.f32 %v771, %v783
        %v788 = vmax.f32 %v772, %v782
        %v789 = vmax.f32 %v773, %v785
        %790 = vrot.lane.b32.xlu0 %v786, 2
        %v791 = vpop.permute.xlu0 %790
        %792 = vrot.lane.b32.xlu0 %v787, 2
        %v793 = vpop.permute.xlu0 %792
        %794 = vrot.lane.b32.xlu0 %v788, 2
        %v795 = vpop.permute.xlu0 %794
        %796 = vrot.lane.b32.xlu0 %v789, 2
        %v797 = vpop.permute.xlu0 %796
        %vm798 = vcmp.lt.s32.totalorder %v604, 2
        %v799 = vsel %vm798, %v795, %v797
        %v800 = vsel %vm798, %v793, %v795
        %v801 = vsel %vm798, %v791, %v793
        %v802 = vsel %vm798, %v797, %v791
        %v803 = vsel %vm573, 1, 0
        %v804 = vlaneseq
        %v805 = vshrl.u32 %v804, 7
        %v806 = vsub.s32 0, %v805
        %v807 = vrot.slane %v803, %v806
        %v808 = vlaneseq
        %v809 = vshrl.u32 %v808, 7
        %v810 = vsub.s32 1, %v809
        %v811 = vrot.slane %v803, %v810
        %v812 = vlaneseq
        %v813 = vshrl.u32 %v812, 7
        %v814 = vsub.s32 2, %v813
        %v815 = vrot.slane %v803, %v814
        %v816 = vlaneseq
        %v817 = vshrl.u32 %v816, 7
        %v818 = vsub.s32 3, %v817
        %v819 = vrot.slane %v803, %v818
        %vm820 = vcmp.eq.s32.totalorder %v807, 1
        %vm821 = vcmp.eq.s32.totalorder %v811, 1
        %vm822 = vcmp.eq.s32.totalorder %v815, 1
        %vm823 = vcmp.eq.s32.totalorder %v819, 1
        %v824 = vsel %vm820, 0.0, %v802
        %v825 = vsel %vm821, 0.0, %v801
        %v826 = vsel %vm822, 0.0, %v800
        %v827 = vsel %vm823, 0.0, %v799
        %vm828 = vcmp.eq.s32.totalorder %v571, 126
        %829 = vrot.lane.b32.xlu0 %v786, 126
        %v830 = vpop.permute.xlu0 %829
        %831 = vrot.lane.b32.xlu0 %v787, 126
        %v832 = vpop.permute.xlu0 %831
        %833 = vrot.lane.b32.xlu0 %v788, 126
        %v834 = vpop.permute.xlu0 %833
        %835 = vrot.lane.b32.xlu0 %v789, 126
        %v836 = vpop.permute.xlu0 %835
        %vm837 = vcmp.lt.s32.totalorder %v604, 126
        %v838 = vsel %vm837, %v834, %v836
        %v839 = vsel %vm837, %v832, %v834
        %v840 = vsel %vm837, %v830, %v832
        %v841 = vsel %vm837, %v836, %v830
        %v842 = vsel %vm828, 1, 0
        %v843 = vlaneseq
        %v844 = vshrl.u32 %v843, 7
        %v845 = vsub.s32 0, %v844
        %v846 = vrot.slane %v842, %v845
        %v847 = vlaneseq
        %v848 = vshrl.u32 %v847, 7
        %v849 = vsub.s32 1, %v848
        %v850 = vrot.slane %v842, %v849
        %v851 = vlaneseq
        %v852 = vshrl.u32 %v851, 7
        %v853 = vsub.s32 2, %v852
        %v854 = vrot.slane %v842, %v853
        %v855 = vlaneseq
        %v856 = vshrl.u32 %v855, 7
        %v857 = vsub.s32 3, %v856
        %v858 = vrot.slane %v842, %v857
        %vm859 = vcmp.eq.s32.totalorder %v846, 1
        %vm860 = vcmp.eq.s32.totalorder %v850, 1
        %vm861 = vcmp.eq.s32.totalorder %v854, 1
        %vm862 = vcmp.eq.s32.totalorder %v858, 1
        %v863 = vsel %vm859, 0.0, %v840
        %v864 = vsel %vm860, 0.0, %v839
        %v865 = vsel %vm861, 0.0, %v838
        %v866 = vsel %vm862, 0.0, %v841
        %v867 = vpack.c.bf16 %v786, %v824
        %v868 = vpack.c.bf16 %v787, %v825
        %v869 = vpack.c.bf16 %v788, %v826
        %v870 = vpack.c.bf16 %v789, %v827
        %v871 = vpack.c.bf16 %v863, %v863
        %v872 = vpack.c.bf16 %v864, %v864
        %v873 = vpack.c.bf16 %v865, %v865
        %v874 = vpack.c.bf16 %v866, %v866
        %v875 = vld [vmem:[%s5] sm:$0xff]
        %v876 = vld [vmem:[%s5 + $0x8] sm:$0xff]
        %v877 = vpack.c.bf16 %v876, %v875
        %v878 = vld [vmem:[%s6] sm:$0xff]
        %v879 = vld [vmem:[%s6 + $0x8] sm:$0xff]
        %881 = vset.pattern.permute.xlu0 0
        %882 = vperm.xlu0 %881, %v878
        %v883 = vpop.permute.xlu0 %882
        %886 = vset.pattern.permute.xlu0 0
        %887 = vperm.xlu0 %886, %v879
        %v888 = vpop.permute.xlu0 %887
        %vm890 = vcmask 195584
        %v892 = vsel %vm890, %v877, 0
        %vm894 = vcmask 1043456
        %v896 = vsel %vm894, %v871, 0
        %v899 = vsel %vm894, %v872, 0
        %v902 = vsel %vm894, %v873, 0
        %v905 = vsel %vm894, %v874, 0
        %907 = vmatprep.subr.bf16.mxu0 0
        %908 = vmatpush1.bf16.msra.mxu0 0
        %909 = vmatprep.subr.bf16.mxu0 0
        %910 = vmatpush1.bf16.msra.mxu0 0
        %911 = vmatprep.subr.bf16.mxu0 0
        %912 = vmatpush1.bf16.msra.mxu0 0
        %913 = vmatprep.subr.bf16.mxu0 0
        %914 = vmatpush1.bf16.msra.mxu0 0
        %915 = vmatprep.subr.bf16.mxu0 0
        %916 = vmatpush1.bf16.msra.mxu0 0
        %917 = vmatprep.subr.bf16.mxu0 0
        %918 = vmatpush1.bf16.msra.mxu0 0
        %919 = vmatprep.subr.bf16.mxu0 %v899
        %920 = vmatpush1.bf16.msra.mxu0 %v896
        %921 = vmatprep.subr.bf16.mxu0 %v868
        %922 = vmatpush1.bf16.msra.mxu0 %v867
        %923 = vmatprep.subr.bf16.mxu0 0
        %924 = vmatpush2.bf16.msra.mxu0 0
        %925 = vmatprep.subr.bf16.mxu0 0
        %926 = vmatpush2.bf16.msra.mxu0 0
        %927 = vmatprep.subr.bf16.mxu0 0
        %928 = vmatpush2.bf16.msra.mxu0 0
        %929 = vmatprep.subr.bf16.mxu0 0
        %930 = vmatpush2.bf16.msra.mxu0 0
        %931 = vmatprep.subr.bf16.mxu0 0
        %932 = vmatpush2.bf16.msra.mxu0 0
        %933 = vmatprep.subr.bf16.mxu0 0
        %934 = vmatpush2.bf16.msra.mxu0 0
        %935 = vmatprep.subr.bf16.mxu0 0
        %936 = vmatpush2.bf16.msra.mxu0 0
        %937 = vmatprep.subr.bf16.mxu0 0
        %938 = vmatpush2.bf16.msra.mxu0 0
        %939 = vmatprep.mubr.bf16.mxu0 0
        %940 = vmatmul.mubr.bf16.gmra.mxu0 %v892
        %v941 = vpop.f32.mrf.mxu0
        %v942 = vadd.f32 %v883, %v941
        %v943 = vpop.f32.mrf.mxu0
        %v944 = vadd.f32 %v883, %v943
        %v945 = vpop.f32.mrf.mxu0
        %v946 = vadd.f32 %v888, %v945
        %v947 = vpop.f32.mrf.mxu0
        %v948 = vadd.f32 %v888, %v947
        %949 = vdwg.mxu0
        %950 = vmatprep.subr.bf16.mxu0 0
        %951 = vmatpush1.bf16.msra.mxu0 0
        %952 = vmatprep.subr.bf16.mxu0 0
        %953 = vmatpush1.bf16.msra.mxu0 0
        %954 = vmatprep.subr.bf16.mxu0 0
        %955 = vmatpush1.bf16.msra.mxu0 0
        %956 = vmatprep.subr.bf16.mxu0 0
        %957 = vmatpush1.bf16.msra.mxu0 0
        %958 = vmatprep.subr.bf16.mxu0 0
        %959 = vmatpush1.bf16.msra.mxu0 0
        %960 = vmatprep.subr.bf16.mxu0 0
        %961 = vmatpush1.bf16.msra.mxu0 0
        %962 = vmatprep.subr.bf16.mxu0 %v905
        %963 = vmatpush1.bf16.msra.mxu0 %v902
        %964 = vmatprep.subr.bf16.mxu0 %v870
        %965 = vmatpush1.bf16.msra.mxu0 %v869
        %966 = vmatprep.subr.bf16.mxu0 0
        %967 = vmatpush2.bf16.msra.mxu0 0
        %968 = vmatprep.subr.bf16.mxu0 0
        %969 = vmatpush2.bf16.msra.mxu0 0
        %970 = vmatprep.subr.bf16.mxu0 0
        %971 = vmatpush2.bf16.msra.mxu0 0
        %972 = vmatprep.subr.bf16.mxu0 0
        %973 = vmatpush2.bf16.msra.mxu0 0
        %974 = vmatprep.subr.bf16.mxu0 0
        %975 = vmatpush2.bf16.msra.mxu0 0
        %976 = vmatprep.subr.bf16.mxu0 0
        %977 = vmatpush2.bf16.msra.mxu0 0
        %978 = vmatprep.subr.bf16.mxu0 0
        %979 = vmatpush2.bf16.msra.mxu0 0
        %980 = vmatprep.subr.bf16.mxu0 0
        %981 = vmatpush2.bf16.msra.mxu0 0
        %982 = vmatprep.mubr.bf16.mxu0 0
        %983 = vmatmul.mubr.bf16.gmra.mxu0 %v892
        %v984 = vpop.f32.mrf.mxu0
        %v985 = vadd.f32 %v883, %v984
        %v986 = vpop.f32.mrf.mxu0
        %v987 = vadd.f32 %v883, %v986
        %v988 = vpop.f32.mrf.mxu0
        %v989 = vadd.f32 %v888, %v988
        %v990 = vpop.f32.mrf.mxu0
        %v991 = vadd.f32 %v888, %v990
        %992 = vdwg.mxu0
        %v993 = vmax.f32 %v942, 0.0
        %v994 = vmax.f32 %v944, 0.0
        %v995 = vmax.f32 %v985, 0.0
        %v996 = vmax.f32 %v987, 0.0
        %v997 = vmax.f32 %v946, 0.0
        %v998 = vmax.f32 %v948, 0.0
        %v999 = vmax.f32 %v989, 0.0
        %v1000 = vmax.f32 %v991, 0.0
        %1001 = vrot.lane.b32.xlu0 %v993, 126
        %v1002 = vpop.permute.xlu0 %1001
        %1003 = vrot.lane.b32.xlu0 %v997, 126
        %v1004 = vpop.permute.xlu0 %1003
        %1005 = vrot.lane.b32.xlu0 %v994, 126
        %v1006 = vpop.permute.xlu0 %1005
        %1007 = vrot.lane.b32.xlu0 %v998, 126
        %v1008 = vpop.permute.xlu0 %1007
        %1009 = vrot.lane.b32.xlu0 %v995, 126
        %v1010 = vpop.permute.xlu0 %1009
        %1011 = vrot.lane.b32.xlu0 %v999, 126
        %v1012 = vpop.permute.xlu0 %1011
        %1013 = vrot.lane.b32.xlu0 %v996, 126
        %v1014 = vpop.permute.xlu0 %1013
        %1015 = vrot.lane.b32.xlu0 %v1000, 126
        %v1016 = vpop.permute.xlu0 %1015
        %v1017 = vsel %vm837, %v1010, %v1014
        %v1018 = vsel %vm837, %v1012, %v1016
        %v1019 = vsel %vm837, %v1006, %v1010
        %v1020 = vsel %vm837, %v1008, %v1012
        %v1021 = vsel %vm837, %v1002, %v1006
        %v1022 = vsel %vm837, %v1004, %v1008
        %v1023 = vsel %vm837, %v1014, %v1002
        %v1024 = vsel %vm837, %v1016, %v1004
        %v1025 = vmax.f32 %v993, %v1021
        %v1026 = vmax.f32 %v994, %v1019
        %v1027 = vmax.f32 %v995, %v1017
        %v1028 = vmax.f32 %v996, %v1023
        %v1029 = vmax.f32 %v997, %v1022
        %v1030 = vmax.f32 %v998, %v1020
        %v1031 = vmax.f32 %v999, %v1018
        %v1032 = vmax.f32 %v1000, %v1024
        %1033 = vrot.lane.b32.xlu0 %v1025, 4
        %v1034 = vpop.permute.xlu0 %1033
        %1035 = vrot.lane.b32.xlu0 %v1029, 4
        %v1036 = vpop.permute.xlu0 %1035
        %1037 = vrot.lane.b32.xlu0 %v1026, 4
        %v1038 = vpop.permute.xlu0 %1037
        %1039 = vrot.lane.b32.xlu0 %v1030, 4
        %v1040 = vpop.permute.xlu0 %1039
        %1041 = vrot.lane.b32.xlu0 %v1027, 4
        %v1042 = vpop.permute.xlu0 %1041
        %1043 = vrot.lane.b32.xlu0 %v1031, 4
        %v1044 = vpop.permute.xlu0 %1043
        %1045 = vrot.lane.b32.xlu0 %v1028, 4
        %v1046 = vpop.permute.xlu0 %1045
        %1047 = vrot.lane.b32.xlu0 %v1032, 4
        %v1048 = vpop.permute.xlu0 %1047
        %vm1049 = vcmp.lt.s32.totalorder %v604, 4
        %v1050 = vsel %vm1049, %v1042, %v1046
        %v1051 = vsel %vm1049, %v1044, %v1048
        %v1052 = vsel %vm1049, %v1038, %v1042
        %v1053 = vsel %vm1049, %v1040, %v1044
        %v1054 = vsel %vm1049, %v1034, %v1038
        %v1055 = vsel %vm1049, %v1036, %v1040
        %v1056 = vsel %vm1049, %v1046, %v1034
        %v1057 = vsel %vm1049, %v1048, %v1036
        %v1058 = vsel %vm820, 0.0, %v1056
        %v1059 = vsel %vm821, 0.0, %v1054
        %v1060 = vsel %vm822, 0.0, %v1052
        %v1061 = vsel %vm823, 0.0, %v1050
        %v1062 = vsel %vm820, 0.0, %v1057
        %v1063 = vsel %vm821, 0.0, %v1055
        %v1064 = vsel %vm822, 0.0, %v1053
        %v1065 = vsel %vm823, 0.0, %v1051
        %vm1066 = vcmp.eq.s32.totalorder %v571, 124
        %1067 = vrot.lane.b32.xlu0 %v1025, 124
        %v1068 = vpop.permute.xlu0 %1067
        %1069 = vrot.lane.b32.xlu0 %v1029, 124
        %v1070 = vpop.permute.xlu0 %1069
        %1071 = vrot.lane.b32.xlu0 %v1026, 124
        %v1072 = vpop.permute.xlu0 %1071
        %1073 = vrot.lane.b32.xlu0 %v1030, 124
        %v1074 = vpop.permute.xlu0 %1073
        %1075 = vrot.lane.b32.xlu0 %v1027, 124
        %v1076 = vpop.permute.xlu0 %1075
        %1077 = vrot.lane.b32.xlu0 %v1031, 124
        %v1078 = vpop.permute.xlu0 %1077
        %1079 = vrot.lane.b32.xlu0 %v1028, 124
        %v1080 = vpop.permute.xlu0 %1079
        %1081 = vrot.lane.b32.xlu0 %v1032, 124
        %v1082 = vpop.permute.xlu0 %1081
        %vm1083 = vcmp.lt.s32.totalorder %v604, 124
        %v1084 = vsel %vm1083, %v1076, %v1080
        %v1085 = vsel %vm1083, %v1078, %v1082
        %v1086 = vsel %vm1083, %v1072, %v1076
        %v1087 = vsel %vm1083, %v1074, %v1078
        %v1088 = vsel %vm1083, %v1068, %v1072
        %v1089 = vsel %vm1083, %v1070, %v1074
        %v1090 = vsel %vm1083, %v1080, %v1068
        %v1091 = vsel %vm1083, %v1082, %v1070
        %v1092 = vsel %vm1066, 1, 0
        %v1093 = vlaneseq
        %v1094 = vshrl.u32 %v1093, 7
        %v1095 = vsub.s32 0, %v1094
        %v1096 = vrot.slane %v1092, %v1095
        %v1097 = vlaneseq
        %v1098 = vshrl.u32 %v1097, 7
        %v1099 = vsub.s32 1, %v1098
        %v1100 = vrot.slane %v1092, %v1099
        %v1101 = vlaneseq
        %v1102 = vshrl.u32 %v1101, 7
        %v1103 = vsub.s32 2, %v1102
        %v1104 = vrot.slane %v1092, %v1103
        %v1105 = vlaneseq
        %v1106 = vshrl.u32 %v1105, 7
        %v1107 = vsub.s32 3, %v1106
        %v1108 = vrot.slane %v1092, %v1107
        %vm1109 = vcmp.eq.s32.totalorder %v1096, 1
        %vm1110 = vcmp.eq.s32.totalorder %v1100, 1
        %vm1111 = vcmp.eq.s32.totalorder %v1104, 1
        %vm1112 = vcmp.eq.s32.totalorder %v1108, 1
        %v1113 = vsel %vm1109, 0.0, %v1088
        %v1114 = vsel %vm1110, 0.0, %v1086
        %v1115 = vsel %vm1111, 0.0, %v1084
        %v1116 = vsel %vm1112, 0.0, %v1090
        %v1117 = vsel %vm1109, 0.0, %v1089
        %v1118 = vsel %vm1110, 0.0, %v1087
        %v1119 = vsel %vm1111, 0.0, %v1085
        %v1120 = vsel %vm1112, 0.0, %v1091
        %v1121 = vpack.c.bf16 %v1062, %v1058
        %v1122 = vpack.c.bf16 %v1063, %v1059
        %v1123 = vpack.c.bf16 %v1064, %v1060
        %v1124 = vpack.c.bf16 %v1065, %v1061
        %v1125 = vpack.c.bf16 %v1029, %v1025
        %v1126 = vpack.c.bf16 %v1030, %v1026
        %v1127 = vpack.c.bf16 %v1031, %v1027
        %v1128 = vpack.c.bf16 %v1032, %v1028
        %v1129 = vpack.c.bf16 %v1117, %v1113
        %v1130 = vpack.c.bf16 %v1118, %v1114
        %v1131 = vpack.c.bf16 %v1119, %v1115
        %v1132 = vpack.c.bf16 %v1120, %v1116
        %v1133 = vld [vmem:[%s7] sm:$0xff]
        %v1134 = vld [vmem:[%s7 + $0x8] sm:$0xff]
        %v1135 = vld [vmem:[%s7 + $0x10] sm:$0xff]
        %v1136 = vld [vmem:[%s7 + $0x18] sm:$0xff]
        %v1137 = vpack.c.bf16 %v1134, %v1133
        %v1138 = vpack.c.bf16 %v1136, %v1135
        %v1139 = vld [vmem:[%s8] sm:$0xff]
        %v1140 = vld [vmem:[%s8 + $0x8] sm:$0xff]
        %v1141 = vld [vmem:[%s8 + $0x10] sm:$0xff]
        %v1142 = vld [vmem:[%s8 + $0x18] sm:$0xff]
        %1144 = vset.pattern.permute.xlu0 0
        %1145 = vperm.xlu0 %1144, %v1139
        %v1146 = vpop.permute.xlu0 %1145
        %1149 = vset.pattern.permute.xlu0 0
        %1150 = vperm.xlu0 %1149, %v1140
        %v1151 = vpop.permute.xlu0 %1150
        %1154 = vset.pattern.permute.xlu0 0
        %1155 = vperm.xlu0 %1154, %v1141
        %v1156 = vpop.permute.xlu0 %1155
        %1159 = vset.pattern.permute.xlu0 0
        %1160 = vperm.xlu0 %1159, %v1142
        %v1161 = vpop.permute.xlu0 %1160
        %vm1163 = vcmask 392192
        %v1165 = vsel %vm1163, %v1137, 0
        %v1168 = vsel %vm1163, %v1138, 0
        %1170 = vmatprep.subr.bf16.mxu0 0
        %1171 = vmatpush1.bf16.msra.mxu0 0
        %1172 = vmatprep.subr.bf16.mxu0 0
        %1173 = vmatpush1.bf16.msra.mxu0 0
        %1174 = vmatprep.subr.bf16.mxu0 0
        %1175 = vmatpush1.bf16.msra.mxu0 0
        %1176 = vmatprep.subr.bf16.mxu0 0
        %1177 = vmatpush1.bf16.msra.mxu0 0
        %1178 = vmatprep.subr.bf16.mxu0 0
        %1179 = vmatpush1.bf16.msra.mxu0 0
        %1180 = vmatprep.subr.bf16.mxu0 %v1130
        %1181 = vmatpush1.bf16.msra.mxu0 %v1129
        %1182 = vmatprep.subr.bf16.mxu0 %v1126
        %1183 = vmatpush1.bf16.msra.mxu0 %v1125
        %1184 = vmatprep.subr.bf16.mxu0 %v1122
        %1185 = vmatpush1.bf16.msra.mxu0 %v1121
        %1186 = vmatprep.subr.bf16.mxu0 0
        %1187 = vmatpush2.bf16.msra.mxu0 0
        %1188 = vmatprep.subr.bf16.mxu0 0
        %1189 = vmatpush2.bf16.msra.mxu0 0
        %1190 = vmatprep.subr.bf16.mxu0 0
        %1191 = vmatpush2.bf16.msra.mxu0 0
        %1192 = vmatprep.subr.bf16.mxu0 0
        %1193 = vmatpush2.bf16.msra.mxu0 0
        %1194 = vmatprep.subr.bf16.mxu0 0
        %1195 = vmatpush2.bf16.msra.mxu0 0
        %1196 = vmatprep.subr.bf16.mxu0 0
        %1197 = vmatpush2.bf16.msra.mxu0 0
        %1198 = vmatprep.subr.bf16.mxu0 0
        %1199 = vmatpush2.bf16.msra.mxu0 0
        %1200 = vmatprep.subr.bf16.mxu0 0
        %1201 = vmatpush2.bf16.msra.mxu0 0
        %1202 = vmatprep.mubr.bf16.mxu0 0
        %1203 = vmatmul.mubr.bf16.gmra.mxu0 %v1165
        %v1204 = vpop.f32.mrf.mxu0
        %v1205 = vadd.f32 %v1146, %v1204
        %v1206 = vpop.f32.mrf.mxu0
        %v1207 = vadd.f32 %v1146, %v1206
        %v1208 = vpop.f32.mrf.mxu0
        %v1209 = vadd.f32 %v1151, %v1208
        %v1210 = vpop.f32.mrf.mxu0
        %v1211 = vadd.f32 %v1151, %v1210
        %1212 = vmatprep.mubr.bf16.mxu0 0
        %1213 = vmatmul.mubr.bf16.gmra.mxu0 %v1168
        %v1214 = vpop.f32.mrf.mxu0
        %v1215 = vadd.f32 %v1156, %v1214
        %v1216 = vpop.f32.mrf.mxu0
        %v1217 = vadd.f32 %v1156, %v1216
        %v1218 = vpop.f32.mrf.mxu0
        %v1219 = vadd.f32 %v1161, %v1218
        %v1220 = vpop.f32.mrf.mxu0
        %v1221 = vadd.f32 %v1161, %v1220
        %1222 = vdwg.mxu0
        %1223 = vmatprep.subr.bf16.mxu0 0
        %1224 = vmatpush1.bf16.msra.mxu0 0
        %1225 = vmatprep.subr.bf16.mxu0 0
        %1226 = vmatpush1.bf16.msra.mxu0 0
        %1227 = vmatprep.subr.bf16.mxu0 0
        %1228 = vmatpush1.bf16.msra.mxu0 0
        %1229 = vmatprep.subr.bf16.mxu0 0
        %1230 = vmatpush1.bf16.msra.mxu0 0
        %1231 = vmatprep.subr.bf16.mxu0 0
        %1232 = vmatpush1.bf16.msra.mxu0 0
        %1233 = vmatprep.subr.bf16.mxu0 %v1132
        %1234 = vmatpush1.bf16.msra.mxu0 %v1131
        %1235 = vmatprep.subr.bf16.mxu0 %v1128
        %1236 = vmatpush1.bf16.msra.mxu0 %v1127
        %1237 = vmatprep.subr.bf16.mxu0 %v1124
        %1238 = vmatpush1.bf16.msra.mxu0 %v1123
        %1239 = vmatprep.subr.bf16.mxu0 0
        %1240 = vmatpush2.bf16.msra.mxu0 0
        %1241 = vmatprep.subr.bf16.mxu0 0
        %1242 = vmatpush2.bf16.msra.mxu0 0
        %1243 = vmatprep.subr.bf16.mxu0 0
        %1244 = vmatpush2.bf16.msra.mxu0 0
        %1245 = vmatprep.subr.bf16.mxu0 0
        %1246 = vmatpush2.bf16.msra.mxu0 0
        %1247 = vmatprep.subr.bf16.mxu0 0
        %1248 = vmatpush2.bf16.msra.mxu0 0
        %1249 = vmatprep.subr.bf16.mxu0 0
        %1250 = vmatpush2.bf16.msra.mxu0 0
        %1251 = vmatprep.subr.bf16.mxu0 0
        %1252 = vmatpush2.bf16.msra.mxu0 0
        %1253 = vmatprep.subr.bf16.mxu0 0
        %1254 = vmatpush2.bf16.msra.mxu0 0
        %1255 = vmatprep.mubr.bf16.mxu0 0
        %1256 = vmatmul.mubr.bf16.gmra.mxu0 %v1165
        %v1257 = vpop.f32.mrf.mxu0
        %v1258 = vadd.f32 %v1146, %v1257
        %v1259 = vpop.f32.mrf.mxu0
        %v1260 = vadd.f32 %v1146, %v1259
        %v1261 = vpop.f32.mrf.mxu0
        %v1262 = vadd.f32 %v1151, %v1261
        %v1263 = vpop.f32.mrf.mxu0
        %v1264 = vadd.f32 %v1151, %v1263
        %1265 = vmatprep.mubr.bf16.mxu0 0
        %1266 = vmatmul.mubr.bf16.gmra.mxu0 %v1168
        %v1267 = vpop.f32.mrf.mxu0
        %v1268 = vadd.f32 %v1156, %v1267
        %v1269 = vpop.f32.mrf.mxu0
        %v1270 = vadd.f32 %v1156, %v1269
        %v1271 = vpop.f32.mrf.mxu0
        %v1272 = vadd.f32 %v1161, %v1271
        %v1273 = vpop.f32.mrf.mxu0
        %v1274 = vadd.f32 %v1161, %v1273
        %1275 = vdwg.mxu0
        %v1276 = vmax.f32 %v1205, 0.0
        %v1277 = vmax.f32 %v1207, 0.0
        %v1278 = vmax.f32 %v1258, 0.0
        %v1279 = vmax.f32 %v1260, 0.0
        %v1280 = vmax.f32 %v1209, 0.0
        %v1281 = vmax.f32 %v1211, 0.0
        %v1282 = vmax.f32 %v1262, 0.0
        %v1283 = vmax.f32 %v1264, 0.0
        %v1284 = vmax.f32 %v1215, 0.0
        %v1285 = vmax.f32 %v1217, 0.0
        %v1286 = vmax.f32 %v1268, 0.0
        %v1287 = vmax.f32 %v1270, 0.0
        %v1288 = vmax.f32 %v1219, 0.0
        %v1289 = vmax.f32 %v1221, 0.0
        %v1290 = vmax.f32 %v1272, 0.0
        %v1291 = vmax.f32 %v1274, 0.0
        %1292 = vrot.lane.b32.xlu0 %v1276, 124
        %v1293 = vpop.permute.xlu0 %1292
        %1294 = vrot.lane.b32.xlu0 %v1280, 124
        %v1295 = vpop.permute.xlu0 %1294
        %1296 = vrot.lane.b32.xlu0 %v1284, 124
        %v1297 = vpop.permute.xlu0 %1296
        %1298 = vrot.lane.b32.xlu0 %v1288, 124
        %v1299 = vpop.permute.xlu0 %1298
        %1300 = vrot.lane.b32.xlu0 %v1277, 124
        %v1301 = vpop.permute.xlu0 %1300
        %1302 = vrot.lane.b32.xlu0 %v1281, 124
        %v1303 = vpop.permute.xlu0 %1302
        %1304 = vrot.lane.b32.xlu0 %v1285, 124
        %v1305 = vpop.permute.xlu0 %1304
        %1306 = vrot.lane.b32.xlu0 %v1289, 124
        %v1307 = vpop.permute.xlu0 %1306
        %1308 = vrot.lane.b32.xlu0 %v1278, 124
        %v1309 = vpop.permute.xlu0 %1308
        %1310 = vrot.lane.b32.xlu0 %v1282, 124
        %v1311 = vpop.permute.xlu0 %1310
        %1312 = vrot.lane.b32.xlu0 %v1286, 124
        %v1313 = vpop.permute.xlu0 %1312
        %1314 = vrot.lane.b32.xlu0 %v1290, 124
        %v1315 = vpop.permute.xlu0 %1314
        %1316 = vrot.lane.b32.xlu0 %v1279, 124
        %v1317 = vpop.permute.xlu0 %1316
        %1318 = vrot.lane.b32.xlu0 %v1283, 124
        %v1319 = vpop.permute.xlu0 %1318
        %1320 = vrot.lane.b32.xlu0 %v1287, 124
        %v1321 = vpop.permute.xlu0 %1320
        %1322 = vrot.lane.b32.xlu0 %v1291, 124
        %v1323 = vpop.permute.xlu0 %1322
        %v1324 = vsel %vm1083, %v1309, %v1317
        %v1325 = vsel %vm1083, %v1311, %v1319
        %v1326 = vsel %vm1083, %v1313, %v1321
        %v1327 = vsel %vm1083, %v1315, %v1323
        %v1328 = vsel %vm1083, %v1301, %v1309
        %v1329 = vsel %vm1083, %v1303, %v1311
        %v1330 = vsel %vm1083, %v1305, %v1313
        %v1331 = vsel %vm1083, %v1307, %v1315
        %v1332 = vsel %vm1083, %v1293, %v1301
        %v1333 = vsel %vm1083, %v1295, %v1303
        %v1334 = vsel %vm1083, %v1297, %v1305
        %v1335 = vsel %vm1083, %v1299, %v1307
        %v1336 = vsel %vm1083, %v1317, %v1293
        %v1337 = vsel %vm1083, %v1319, %v1295
        %v1338 = vsel %vm1083, %v1321, %v1297
        %v1339 = vsel %vm1083, %v1323, %v1299
        %v1340 = vmax.f32 %v1276, %v1332
        %v1341 = vmax.f32 %v1277, %v1328
        %v1342 = vmax.f32 %v1278, %v1324
        %v1343 = vmax.f32 %v1279, %v1336
        %v1344 = vmax.f32 %v1280, %v1333
        %v1345 = vmax.f32 %v1281, %v1329
        %v1346 = vmax.f32 %v1282, %v1325
        %v1347 = vmax.f32 %v1283, %v1337
        %v1348 = vmax.f32 %v1284, %v1334
        %v1349 = vmax.f32 %v1285, %v1330
        %v1350 = vmax.f32 %v1286, %v1326
        %v1351 = vmax.f32 %v1287, %v1338
        %v1352 = vmax.f32 %v1288, %v1335
        %v1353 = vmax.f32 %v1289, %v1331
        %v1354 = vmax.f32 %v1290, %v1327
        %v1355 = vmax.f32 %v1291, %v1339
        %1356 = vrot.lane.b32.xlu0 %v1340, 8
        %v1357 = vpop.permute.xlu0 %1356
        %1358 = vrot.lane.b32.xlu0 %v1344, 8
        %v1359 = vpop.permute.xlu0 %1358
        %1360 = vrot.lane.b32.xlu0 %v1348, 8
        %v1361 = vpop.permute.xlu0 %1360
        %1362 = vrot.lane.b32.xlu0 %v1352, 8
        %v1363 = vpop.permute.xlu0 %1362
        %1364 = vrot.lane.b32.xlu0 %v1341, 8
        %v1365 = vpop.permute.xlu0 %1364
        %1366 = vrot.lane.b32.xlu0 %v1345, 8
        %v1367 = vpop.permute.xlu0 %1366
        %1368 = vrot.lane.b32.xlu0 %v1349, 8
        %v1369 = vpop.permute.xlu0 %1368
        %1370 = vrot.lane.b32.xlu0 %v1353, 8
        %v1371 = vpop.permute.xlu0 %1370
        %1372 = vrot.lane.b32.xlu0 %v1342, 8
        %v1373 = vpop.permute.xlu0 %1372
        %1374 = vrot.lane.b32.xlu0 %v1346, 8
        %v1375 = vpop.permute.xlu0 %1374
        %1376 = vrot.lane.b32.xlu0 %v1350, 8
        %v1377 = vpop.permute.xlu0 %1376
        %1378 = vrot.lane.b32.xlu0 %v1354, 8
        %v1379 = vpop.permute.xlu0 %1378
        %1380 = vrot.lane.b32.xlu0 %v1343, 8
        %v1381 = vpop.permute.xlu0 %1380
        %1382 = vrot.lane.b32.xlu0 %v1347, 8
        %v1383 = vpop.permute.xlu0 %1382
        %1384 = vrot.lane.b32.xlu0 %v1351, 8
        %v1385 = vpop.permute.xlu0 %1384
        %1386 = vrot.lane.b32.xlu0 %v1355, 8
        %v1387 = vpop.permute.xlu0 %1386
        %vm1388 = vcmp.lt.s32.totalorder %v604, 8
        %v1389 = vsel %vm1388, %v1373, %v1381
        %v1390 = vsel %vm1388, %v1375, %v1383
        %v1391 = vsel %vm1388, %v1377, %v1385
        %v1392 = vsel %vm1388, %v1379, %v1387
        %v1393 = vsel %vm1388, %v1365, %v1373
        %v1394 = vsel %vm1388, %v1367, %v1375
        %v1395 = vsel %vm1388, %v1369, %v1377
        %v1396 = vsel %vm1388, %v1371, %v1379
        %v1397 = vsel %vm1388, %v1357, %v1365
        %v1398 = vsel %vm1388, %v1359, %v1367
        %v1399 = vsel %vm1388, %v1361, %v1369
        %v1400 = vsel %vm1388, %v1363, %v1371
        %v1401 = vsel %vm1388, %v1381, %v1357
        %v1402 = vsel %vm1388, %v1383, %v1359
        %v1403 = vsel %vm1388, %v1385, %v1361
        %v1404 = vsel %vm1388, %v1387, %v1363
        %v1405 = vsel %vm820, 0.0, %v1401
        %v1406 = vsel %vm821, 0.0, %v1397
        %v1407 = vsel %vm822, 0.0, %v1393
        %v1408 = vsel %vm823, 0.0, %v1389
        %v1409 = vsel %vm820, 0.0, %v1402
        %v1410 = vsel %vm821, 0.0, %v1398
        %v1411 = vsel %vm822, 0.0, %v1394
        %v1412 = vsel %vm823, 0.0, %v1390
        %v1413 = vsel %vm820, 0.0, %v1403
        %v1414 = vsel %vm821, 0.0, %v1399
        %v1415 = vsel %vm822, 0.0, %v1395
        %v1416 = vsel %vm823, 0.0, %v1391
        %v1417 = vsel %vm820, 0.0, %v1404
        %v1418 = vsel %vm821, 0.0, %v1400
        %v1419 = vsel %vm822, 0.0, %v1396
        %v1420 = vsel %vm823, 0.0, %v1392
        %vm1421 = vcmp.eq.s32.totalorder %v571, 120
        %1422 = vrot.lane.b32.xlu0 %v1340, 120
        %v1423 = vpop.permute.xlu0 %1422
        %1424 = vrot.lane.b32.xlu0 %v1344, 120
        %v1425 = vpop.permute.xlu0 %1424
        %1426 = vrot.lane.b32.xlu0 %v1348, 120
        %v1427 = vpop.permute.xlu0 %1426
        %1428 = vrot.lane.b32.xlu0 %v1352, 120
        %v1429 = vpop.permute.xlu0 %1428
        %1430 = vrot.lane.b32.xlu0 %v1341, 120
        %v1431 = vpop.permute.xlu0 %1430
        %1432 = vrot.lane.b32.xlu0 %v1345, 120
        %v1433 = vpop.permute.xlu0 %1432
        %1434 = vrot.lane.b32.xlu0 %v1349, 120
        %v1435 = vpop.permute.xlu0 %1434
        %1436 = vrot.lane.b32.xlu0 %v1353, 120
        %v1437 = vpop.permute.xlu0 %1436
        %1438 = vrot.lane.b32.xlu0 %v1342, 120
        %v1439 = vpop.permute.xlu0 %1438
        %1440 = vrot.lane.b32.xlu0 %v1346, 120
        %v1441 = vpop.permute.xlu0 %1440
        %1442 = vrot.lane.b32.xlu0 %v1350, 120
        %v1443 = vpop.permute.xlu0 %1442
        %1444 = vrot.lane.b32.xlu0 %v1354, 120
        %v1445 = vpop.permute.xlu0 %1444
        %1446 = vrot.lane.b32.xlu0 %v1343, 120
        %v1447 = vpop.permute.xlu0 %1446
        %1448 = vrot.lane.b32.xlu0 %v1347, 120
        %v1449 = vpop.permute.xlu0 %1448
        %1450 = vrot.lane.b32.xlu0 %v1351, 120
        %v1451 = vpop.permute.xlu0 %1450
        %1452 = vrot.lane.b32.xlu0 %v1355, 120
        %v1453 = vpop.permute.xlu0 %1452
        %vm1454 = vcmp.lt.s32.totalorder %v604, 120
        %v1455 = vsel %vm1454, %v1439, %v1447
        %v1456 = vsel %vm1454, %v1441, %v1449
        %v1457 = vsel %vm1454, %v1443, %v1451
        %v1458 = vsel %vm1454, %v1445, %v1453
        %v1459 = vsel %vm1454, %v1431, %v1439
        %v1460 = vsel %vm1454, %v1433, %v1441
        %v1461 = vsel %vm1454, %v1435, %v1443
        %v1462 = vsel %vm1454, %v1437, %v1445
        %v1463 = vsel %vm1454, %v1423, %v1431
        %v1464 = vsel %vm1454, %v1425, %v1433
        %v1465 = vsel %vm1454, %v1427, %v1435
        %v1466 = vsel %vm1454, %v1429, %v1437
        %v1467 = vsel %vm1454, %v1447, %v1423
        %v1468 = vsel %vm1454, %v1449, %v1425
        %v1469 = vsel %vm1454, %v1451, %v1427
        %v1470 = vsel %vm1454, %v1453, %v1429
        %v1471 = vsel %vm1421, 1, 0
        %v1472 = vlaneseq
        %v1473 = vshrl.u32 %v1472, 7
        %v1474 = vsub.s32 0, %v1473
        %v1475 = vrot.slane %v1471, %v1474
        %v1476 = vlaneseq
        %v1477 = vshrl.u32 %v1476, 7
        %v1478 = vsub.s32 1, %v1477
        %v1479 = vrot.slane %v1471, %v1478
        %v1480 = vlaneseq
        %v1481 = vshrl.u32 %v1480, 7
        %v1482 = vsub.s32 2, %v1481
        %v1483 = vrot.slane %v1471, %v1482
        %v1484 = vlaneseq
        %v1485 = vshrl.u32 %v1484, 7
        %v1486 = vsub.s32 3, %v1485
        %v1487 = vrot.slane %v1471, %v1486
        %vm1488 = vcmp.eq.s32.totalorder %v1475, 1
        %vm1489 = vcmp.eq.s32.totalorder %v1479, 1
        %vm1490 = vcmp.eq.s32.totalorder %v1483, 1
        %vm1491 = vcmp.eq.s32.totalorder %v1487, 1
        %v1492 = vsel %vm1488, 0.0, %v1463
        %v1493 = vsel %vm1489, 0.0, %v1459
        %v1494 = vsel %vm1490, 0.0, %v1455
        %v1495 = vsel %vm1491, 0.0, %v1467
        %v1496 = vsel %vm1488, 0.0, %v1464
        %v1497 = vsel %vm1489, 0.0, %v1460
        %v1498 = vsel %vm1490, 0.0, %v1456
        %v1499 = vsel %vm1491, 0.0, %v1468
        %v1500 = vsel %vm1488, 0.0, %v1465
        %v1501 = vsel %vm1489, 0.0, %v1461
        %v1502 = vsel %vm1490, 0.0, %v1457
        %v1503 = vsel %vm1491, 0.0, %v1469
        %v1504 = vsel %vm1488, 0.0, %v1466
        %v1505 = vsel %vm1489, 0.0, %v1462
        %v1506 = vsel %vm1490, 0.0, %v1458
        %v1507 = vsel %vm1491, 0.0, %v1470
        %v1508 = vpack.c.bf16 %v1409, %v1405
        %v1509 = vpack.c.bf16 %v1410, %v1406
        %v1510 = vpack.c.bf16 %v1411, %v1407
        %v1511 = vpack.c.bf16 %v1412, %v1408
        %v1512 = vpack.c.bf16 %v1417, %v1413
        %v1513 = vpack.c.bf16 %v1418, %v1414
        %v1514 = vpack.c.bf16 %v1419, %v1415
        %v1515 = vpack.c.bf16 %v1420, %v1416
        %v1516 = vpack.c.bf16 %v1344, %v1340
        %v1517 = vpack.c.bf16 %v1345, %v1341
        %v1518 = vpack.c.bf16 %v1346, %v1342
        %v1519 = vpack.c.bf16 %v1347, %v1343
        %v1520 = vpack.c.bf16 %v1352, %v1348
        %v1521 = vpack.c.bf16 %v1353, %v1349
        %v1522 = vpack.c.bf16 %v1354, %v1350
        %v1523 = vpack.c.bf16 %v1355, %v1351
        %v1524 = vpack.c.bf16 %v1496, %v1492
        %v1525 = vpack.c.bf16 %v1497, %v1493
        %v1526 = vpack.c.bf16 %v1498, %v1494
        %v1527 = vpack.c.bf16 %v1499, %v1495
        %v1528 = vpack.c.bf16 %v1504, %v1500
        %v1529 = vpack.c.bf16 %v1505, %v1501
        %v1530 = vpack.c.bf16 %v1506, %v1502
        %v1531 = vpack.c.bf16 %v1507, %v1503
        %v1532 = vld [vmem:[%s9] sm:$0xff]
        %v1533 = vld [vmem:[%s9 + $0x8] sm:$0xff]
        %v1534 = vld [vmem:[%s9 + $0x10] sm:$0xff]
        %v1535 = vld [vmem:[%s9 + $0x18] sm:$0xff]
        %v1536 = vpack.c.bf16 %v1533, %v1532
        %v1537 = vpack.c.bf16 %v1535, %v1534
        %v1538 = vld [vmem:[%s10] sm:$0xff]
        %v1539 = vld [vmem:[%s10 + $0x8] sm:$0xff]
        %v1540 = vld [vmem:[%s10 + $0x10] sm:$0xff]
        %v1541 = vld [vmem:[%s10 + $0x18] sm:$0xff]
        %1543 = vset.pattern.permute.xlu0 0
        %1544 = vperm.xlu0 %1543, %v1538
        %v1545 = vpop.permute.xlu0 %1544
        %1548 = vset.pattern.permute.xlu0 0
        %1549 = vperm.xlu0 %1548, %v1539
        %v1550 = vpop.permute.xlu0 %1549
        %1553 = vset.pattern.permute.xlu0 0
        %1554 = vperm.xlu0 %1553, %v1540
        %v1555 = vpop.permute.xlu0 %1554
        %1558 = vset.pattern.permute.xlu0 0
        %1559 = vperm.xlu0 %1558, %v1541
        %v1560 = vpop.permute.xlu0 %1559
        %vm1562 = vcmask 785408
        %v1564 = vsel %vm1562, %v1536, 0
        %v1567 = vsel %vm1562, %v1537, 0
        %1569 = vmatprep.subr.bf16.mxu0 0
        %1570 = vmatpush1.bf16.msra.mxu0 0
        %1571 = vmatprep.subr.bf16.mxu0 0
        %1572 = vmatpush1.bf16.msra.mxu0 0
        %1573 = vmatprep.subr.bf16.mxu0 %v1529
        %1574 = vmatpush1.bf16.msra.mxu0 %v1528
        %1575 = vmatprep.subr.bf16.mxu0 %v1525
        %1576 = vmatpush1.bf16.msra.mxu0 %v1524
        %1577 = vmatprep.subr.bf16.mxu0 %v1521
        %1578 = vmatpush1.bf16.msra.mxu0 %v1520
        %1579 = vmatprep.subr.bf16.mxu0 %v1517
        %1580 = vmatpush1.bf16.msra.mxu0 %v1516
        %1581 = vmatprep.subr.bf16.mxu0 %v1513
        %1582 = vmatpush1.bf16.msra.mxu0 %v1512
        %1583 = vmatprep.subr.bf16.mxu0 %v1509
        %1584 = vmatpush1.bf16.msra.mxu0 %v1508
        %1585 = vmatprep.subr.bf16.mxu0 0
        %1586 = vmatpush2.bf16.msra.mxu0 0
        %1587 = vmatprep.subr.bf16.mxu0 0
        %1588 = vmatpush2.bf16.msra.mxu0 0
        %1589 = vmatprep.subr.bf16.mxu0 0
        %1590 = vmatpush2.bf16.msra.mxu0 0
        %1591 = vmatprep.subr.bf16.mxu0 0
        %1592 = vmatpush2.bf16.msra.mxu0 0
        %1593 = vmatprep.subr.bf16.mxu0 0
        %1594 = vmatpush2.bf16.msra.mxu0 0
        %1595 = vmatprep.subr.bf16.mxu0 0
        %1596 = vmatpush2.bf16.msra.mxu0 0
        %1597 = vmatprep.subr.bf16.mxu0 0
        %1598 = vmatpush2.bf16.msra.mxu0 0
        %1599 = vmatprep.subr.bf16.mxu0 0
        %1600 = vmatpush2.bf16.msra.mxu0 0
        %1601 = vmatprep.mubr.bf16.mxu0 0
        %1602 = vmatmul.mubr.bf16.gmra.mxu0 %v1564
        %v1603 = vpop.f32.mrf.mxu0
        %v1604 = vadd.f32 %v1545, %v1603
        %v1605 = vpop.f32.mrf.mxu0
        %v1606 = vadd.f32 %v1545, %v1605
        %v1607 = vpop.f32.mrf.mxu0
        %v1608 = vadd.f32 %v1550, %v1607
        %v1609 = vpop.f32.mrf.mxu0
        %v1610 = vadd.f32 %v1550, %v1609
        %1611 = vmatprep.mubr.bf16.mxu0 0
        %1612 = vmatmul.mubr.bf16.gmra.mxu0 %v1567
        %v1613 = vpop.f32.mrf.mxu0
        %v1614 = vadd.f32 %v1555, %v1613
        %v1615 = vpop.f32.mrf.mxu0
        %v1616 = vadd.f32 %v1555, %v1615
        %v1617 = vpop.f32.mrf.mxu0
        %v1618 = vadd.f32 %v1560, %v1617
        %v1619 = vpop.f32.mrf.mxu0
        %v1620 = vadd.f32 %v1560, %v1619
        %1621 = vdwg.mxu0
        %1622 = vmatprep.subr.bf16.mxu0 0
        %1623 = vmatpush1.bf16.msra.mxu0 0
        %1624 = vmatprep.subr.bf16.mxu0 0
        %1625 = vmatpush1.bf16.msra.mxu0 0
        %1626 = vmatprep.subr.bf16.mxu0 %v1531
        %1627 = vmatpush1.bf16.msra.mxu0 %v1530
        %1628 = vmatprep.subr.bf16.mxu0 %v1527
        %1629 = vmatpush1.bf16.msra.mxu0 %v1526
        %1630 = vmatprep.subr.bf16.mxu0 %v1523
        %1631 = vmatpush1.bf16.msra.mxu0 %v1522
        %1632 = vmatprep.subr.bf16.mxu0 %v1519
        %1633 = vmatpush1.bf16.msra.mxu0 %v1518
        %1634 = vmatprep.subr.bf16.mxu0 %v1515
        %1635 = vmatpush1.bf16.msra.mxu0 %v1514
        %1636 = vmatprep.subr.bf16.mxu0 %v1511
        %1637 = vmatpush1.bf16.msra.mxu0 %v1510
        %1638 = vmatprep.subr.bf16.mxu0 0
        %1639 = vmatpush2.bf16.msra.mxu0 0
        %1640 = vmatprep.subr.bf16.mxu0 0
        %1641 = vmatpush2.bf16.msra.mxu0 0
        %1642 = vmatprep.subr.bf16.mxu0 0
        %1643 = vmatpush2.bf16.msra.mxu0 0
        %1644 = vmatprep.subr.bf16.mxu0 0
        %1645 = vmatpush2.bf16.msra.mxu0 0
        %1646 = vmatprep.subr.bf16.mxu0 0
        %1647 = vmatpush2.bf16.msra.mxu0 0
        %1648 = vmatprep.subr.bf16.mxu0 0
        %1649 = vmatpush2.bf16.msra.mxu0 0
        %1650 = vmatprep.subr.bf16.mxu0 0
        %1651 = vmatpush2.bf16.msra.mxu0 0
        %1652 = vmatprep.subr.bf16.mxu0 0
        %1653 = vmatpush2.bf16.msra.mxu0 0
        %1654 = vmatprep.mubr.bf16.mxu0 0
        %1655 = vmatmul.mubr.bf16.gmra.mxu0 %v1564
        %v1656 = vpop.f32.mrf.mxu0
        %v1657 = vadd.f32 %v1545, %v1656
        %v1658 = vpop.f32.mrf.mxu0
        %v1659 = vadd.f32 %v1545, %v1658
        %v1660 = vpop.f32.mrf.mxu0
        %v1661 = vadd.f32 %v1550, %v1660
        %v1662 = vpop.f32.mrf.mxu0
        %v1663 = vadd.f32 %v1550, %v1662
        %1664 = vmatprep.mubr.bf16.mxu0 0
        %1665 = vmatmul.mubr.bf16.gmra.mxu0 %v1567
        %v1666 = vpop.f32.mrf.mxu0
        %v1667 = vadd.f32 %v1555, %v1666
        %v1668 = vpop.f32.mrf.mxu0
        %v1669 = vadd.f32 %v1555, %v1668
        %v1670 = vpop.f32.mrf.mxu0
        %v1671 = vadd.f32 %v1560, %v1670
        %v1672 = vpop.f32.mrf.mxu0
        %v1673 = vadd.f32 %v1560, %v1672
        %1674 = vdwg.mxu0
        %v1675 = vmax.f32 %v1604, 0.0
        %v1676 = vmax.f32 %v1606, 0.0
        %v1677 = vmax.f32 %v1657, 0.0
        %v1678 = vmax.f32 %v1659, 0.0
        %v1679 = vmax.f32 %v1608, 0.0
        %v1680 = vmax.f32 %v1610, 0.0
        %v1681 = vmax.f32 %v1661, 0.0
        %v1682 = vmax.f32 %v1663, 0.0
        %v1683 = vmax.f32 %v1614, 0.0
        %v1684 = vmax.f32 %v1616, 0.0
        %v1685 = vmax.f32 %v1667, 0.0
        %v1686 = vmax.f32 %v1669, 0.0
        %v1687 = vmax.f32 %v1618, 0.0
        %v1688 = vmax.f32 %v1620, 0.0
        %v1689 = vmax.f32 %v1671, 0.0
        %v1690 = vmax.f32 %v1673, 0.0
        %v1691 = vld [vmem:[%s2] sm:$0xff]
        %v1692 = vld [vmem:[%s2 + $0x8] sm:$0xff]
        %v1695 = vcombine.high %v1691, %v1691
        %v1696 = vcombine.high %v1692, %v1692
        %v1699 = vpack.c.bf16 %v1691, %v1691
        %v1700 = vpack.c.bf16 %v1695, %v1695
        %v1701 = vpack.c.bf16 %v1692, %v1692
        %v1702 = vpack.c.bf16 %v1696, %v1696
        %v1703 = vpack.c.bf16 %v1679, %v1675
        %v1704 = vpack.c.bf16 %v1680, %v1676
        %v1705 = vpack.c.bf16 %v1681, %v1677
        %v1706 = vpack.c.bf16 %v1682, %v1678
        %v1707 = vpack.c.bf16 %v1687, %v1683
        %v1708 = vpack.c.bf16 %v1688, %v1684
        %v1709 = vpack.c.bf16 %v1689, %v1685
        %v1710 = vpack.c.bf16 %v1690, %v1686
        %1711 = vmatprep.subr.bf16.mxu0 0
        %1712 = vmatpush1.bf16.xpose.msra.mxu0 0
        %1713 = vmatprep.subr.bf16.mxu0 0
        %1714 = vmatpush1.bf16.xpose.msra.mxu0 0
        %1715 = vmatprep.subr.bf16.mxu0 0
        %1716 = vmatpush1.bf16.xpose.msra.mxu0 0
        %1717 = vmatprep.subr.bf16.mxu0 0
        %1718 = vmatpush1.bf16.xpose.msra.mxu0 0
        %1719 = vmatprep.subr.bf16.mxu0 0
        %1720 = vmatpush1.bf16.xpose.msra.mxu0 0
        %1721 = vmatprep.subr.bf16.mxu0 0
        %1722 = vmatpush1.bf16.xpose.msra.mxu0 0
        %1723 = vmatprep.subr.bf16.mxu0 %v1708
        %1724 = vmatpush1.bf16.xpose.msra.mxu0 %v1707
        %1725 = vmatprep.subr.bf16.mxu0 %v1704
        %1726 = vmatpush1.bf16.xpose.msra.mxu0 %v1703
        %1727 = vmatprep.subr.bf16.mxu0 0
        %1728 = vmatpush2.bf16.xpose.msra.mxu0 0
        %1729 = vmatprep.subr.bf16.mxu0 0
        %1730 = vmatpush2.bf16.xpose.msra.mxu0 0
        %1731 = vmatprep.subr.bf16.mxu0 0
        %1732 = vmatpush2.bf16.xpose.msra.mxu0 0
        %1733 = vmatprep.subr.bf16.mxu0 0
        %1734 = vmatpush2.bf16.xpose.msra.mxu0 0
        %1735 = vmatprep.subr.bf16.mxu0 0
        %1736 = vmatpush2.bf16.xpose.msra.mxu0 0
        %1737 = vmatprep.subr.bf16.mxu0 0
        %1738 = vmatpush2.bf16.xpose.msra.mxu0 0
        %1739 = vmatprep.subr.bf16.mxu0 0
        %1740 = vmatpush2.bf16.xpose.msra.mxu0 0
        %1741 = vmatprep.subr.bf16.mxu0 0
        %1742 = vmatpush2.bf16.xpose.msra.mxu0 0
        %1743 = vmatprep.mubr.bf16.mxu0 %v1700
        %1744 = vmatmul.mubr.bf16.gmra.mxu0 %v1699
        %v1745 = vpop.f32.mrf.mxu0
        %v1746 = vadd.f32 0.0, %v1745
        %v1747 = vpop.f32.mrf.mxu0
        %v1748 = vpop.f32.mrf.mxu0
        %v1749 = vpop.f32.mrf.mxu0
        %1750 = vdwg.mxu0
        %1751 = vmatprep.subr.bf16.mxu0 0
        %1752 = vmatpush1.bf16.xpose.msra.mxu0 0
        %1753 = vmatprep.subr.bf16.mxu0 0
        %1754 = vmatpush1.bf16.xpose.msra.mxu0 0
        %1755 = vmatprep.subr.bf16.mxu0 0
        %1756 = vmatpush1.bf16.xpose.msra.mxu0 0
        %1757 = vmatprep.subr.bf16.mxu0 0
        %1758 = vmatpush1.bf16.xpose.msra.mxu0 0
        %1759 = vmatprep.subr.bf16.mxu0 0
        %1760 = vmatpush1.bf16.xpose.msra.mxu0 0
        %1761 = vmatprep.subr.bf16.mxu0 0
        %1762 = vmatpush1.bf16.xpose.msra.mxu0 0
        %1763 = vmatprep.subr.bf16.mxu0 %v1710
        %1764 = vmatpush1.bf16.xpose.msra.mxu0 %v1709
        %1765 = vmatprep.subr.bf16.mxu0 %v1706
        %1766 = vmatpush1.bf16.xpose.msra.mxu0 %v1705
        %1767 = vmatprep.subr.bf16.mxu0 0
        %1768 = vmatpush2.bf16.xpose.msra.mxu0 0
        %1769 = vmatprep.subr.bf16.mxu0 0
        %1770 = vmatpush2.bf16.xpose.msra.mxu0 0
        %1771 = vmatprep.subr.bf16.mxu0 0
        %1772 = vmatpush2.bf16.xpose.msra.mxu0 0
        %1773 = vmatprep.subr.bf16.mxu0 0
        %1774 = vmatpush2.bf16.xpose.msra.mxu0 0
        %1775 = vmatprep.subr.bf16.mxu0 0
        %1776 = vmatpush2.bf16.xpose.msra.mxu0 0
        %1777 = vmatprep.subr.bf16.mxu0 0
        %1778 = vmatpush2.bf16.xpose.msra.mxu0 0
        %1779 = vmatprep.subr.bf16.mxu0 0
        %1780 = vmatpush2.bf16.xpose.msra.mxu0 0
        %1781 = vmatprep.subr.bf16.mxu0 0
        %1782 = vmatpush2.bf16.xpose.msra.mxu0 0
        %1783 = vmatprep.mubr.bf16.mxu0 %v1702
        %1784 = vmatmul.mubr.bf16.gmra.mxu0 %v1701
        %v1785 = vpop.f32.mrf.mxu0
        %v1786 = vadd.f32 %v1746, %v1785
        %v1787 = vpop.f32.mrf.mxu0
        %v1788 = vpop.f32.mrf.mxu0
        %v1789 = vpop.f32.mrf.mxu0
        %1790 = vdwg.mxu0
        %v1791 = vpack.c.bf16 %v1786, %v1786
        %v1792 = vld [vmem:[%s11] sm:$0xff]
        %v1793 = vld [vmem:[%s11 + $0x8] sm:$0xff]
        %v1794 = vld [vmem:[%s11 + $0x10] sm:$0xff]
        %v1795 = vld [vmem:[%s11 + $0x18] sm:$0xff]
        %v1796 = vpack.c.bf16 %v1793, %v1792
        %v1797 = vpack.c.bf16 %v1795, %v1794
        %v1798 = vld [vmem:[%s12] sm:$0x1]
        %v1800 = vlaneseq
        %v1801 = vshrl.u32 %v1800, 7
        %v1802 = vsub.s32 0, %v1801
        %v1803 = vrot.slane %v1798, %v1802
        %vm1805 = vcmask 261120
        %v1807 = vsel %vm1805, %v1791, 0
        %1809 = vmatprep.subr.bf16.mxu0 0
        %1810 = vmatpush1.bf16.msra.mxu0 0
        %1811 = vmatprep.subr.bf16.mxu0 0
        %1812 = vmatpush1.bf16.msra.mxu0 0
        %1813 = vmatprep.subr.bf16.mxu0 0
        %1814 = vmatpush1.bf16.msra.mxu0 0
        %1815 = vmatprep.subr.bf16.mxu0 0
        %1816 = vmatpush1.bf16.msra.mxu0 0
        %1817 = vmatprep.subr.bf16.mxu0 0
        %1818 = vmatpush1.bf16.msra.mxu0 0
        %1819 = vmatprep.subr.bf16.mxu0 0
        %1820 = vmatpush1.bf16.msra.mxu0 0
        %1821 = vmatprep.subr.bf16.mxu0 0
        %1822 = vmatpush1.bf16.msra.mxu0 %v1797
        %1823 = vmatprep.subr.bf16.mxu0 0
        %1824 = vmatpush1.bf16.msra.mxu0 %v1796
        %1825 = vmatprep.subr.bf16.mxu0 0
        %1826 = vmatpush2.bf16.msra.mxu0 0
        %1827 = vmatprep.subr.bf16.mxu0 0
        %1828 = vmatpush2.bf16.msra.mxu0 0
        %1829 = vmatprep.subr.bf16.mxu0 0
        %1830 = vmatpush2.bf16.msra.mxu0 0
        %1831 = vmatprep.subr.bf16.mxu0 0
        %1832 = vmatpush2.bf16.msra.mxu0 0
        %1833 = vmatprep.subr.bf16.mxu0 0
        %1834 = vmatpush2.bf16.msra.mxu0 0
        %1835 = vmatprep.subr.bf16.mxu0 0
        %1836 = vmatpush2.bf16.msra.mxu0 0
        %1837 = vmatprep.subr.bf16.mxu0 0
        %1838 = vmatpush2.bf16.msra.mxu0 0
        %1839 = vmatprep.subr.bf16.mxu0 0
        %1840 = vmatpush2.bf16.msra.mxu0 0
        %1841 = vmatprep.mubr.bf16.mxu0 0
        %1842 = vmatmul.mubr.bf16.gmra.mxu0 %v1807
        %v1843 = vpop.f32.mrf.mxu0
        %v1844 = vadd.f32 %v1803, %v1843
        %v1845 = vpop.f32.mrf.mxu0
        %v1846 = vpop.f32.mrf.mxu0
        %v1847 = vpop.f32.mrf.mxu0
        %1848 = vdwg.mxu0
        %v1849 = vtanh.pop %v1844
        %v1850 = vld [vmem:[%s13] sm:$0x1]
        %v1852 = vlaneseq
        %v1853 = vshrl.u32 %v1852, 7
        %v1854 = vsub.s32 0, %v1853
        %v1855 = vrot.slane %v1850, %v1854
        %v1857 = vmul.f32 %v1849, %v1855
        %vm1858 = vcmask 125952
        %v1859 = vsel %vm1858, %v1857, 0.0
        %1860 = vadd.xlane.f32.xlu0 %v1859
        %v1861 = vpop.xlane.xlu0 %1860
        %v1862 = vsel %vm894, %v1861, -inf
        %v1863 = vrot.slane %v1862, 4
        %v1864 = vmax.f32 %v1862, %v1863
        %v1865 = vrot.slane %v1864, 2
        %v1866 = vmax.f32 %v1864, %v1865
        %v1867 = vrot.slane %v1866, 1
        %v1868 = vmax.f32 %v1866, %v1867
        %v1869 = vsub.f32 %v1861, %v1868
        %v1870 = vmul.f32 %v1869, 1.442695
        %v1871 = vpow.pop %v1870
        %v1872 = vsel %vm894, %v1871, 0.0
        %v1873 = vrot.slane %v1872, 4
        %v1874 = vadd.f32 %v1872, %v1873
        %v1875 = vrot.slane %v1874, 2
        %v1876 = vadd.f32 %v1874, %v1875
        %v1877 = vrot.slane %v1876, 1
        %v1878 = vadd.f32 %v1876, %v1877
        %v1879 = vrcp.pop %v1878
        %v1880 = vmul.f32 %v1871, %v1879
        %v1881 = vmul.f32 %v1786, %v1880
        %v1883 = vrot.slane %v1881, 1
        %1884 = vrot.lane.b32.xlu0 %v1883, 32
        %v1885 = vpop.permute.xlu0 %1884
        %v1887 = vrot.slane %v1881, 2
        %1888 = vrot.lane.b32.xlu0 %v1887, 64
        %v1889 = vpop.permute.xlu0 %1888
        %v1891 = vrot.slane %v1881, 3
        %1892 = vrot.lane.b32.xlu0 %v1891, 96
        %v1893 = vpop.permute.xlu0 %1892
        %v1895 = vsel %vm1805, %v1881, %v1885
        %vm1896 = vcmask 523264
        %v1897 = vsel %vm1896, %v1895, %v1889
        %v1898 = vsel %vm1562, %v1897, %v1893
        %v1899 = vpack.c.bf16 %v1898, %v1898
        %v1900 = vld [vmem:[%s14] sm:$0xff]
        %v1901 = vld [vmem:[%s14 + $0x8] sm:$0xff]
        %v1902 = vld [vmem:[%s14 + $0x10] sm:$0xff]
        %v1903 = vld [vmem:[%s14 + $0x18] sm:$0xff]
        %v1904 = vld [vmem:[%s14 + $0x20] sm:$0xff]
        %v1905 = vld [vmem:[%s14 + $0x28] sm:$0xff]
        %v1906 = vld [vmem:[%s14 + $0x30] sm:$0xff]
        %v1907 = vld [vmem:[%s14 + $0x38] sm:$0xff]
        %v1908 = vld [vmem:[%s14 + $0x40] sm:$0xff]
        %v1909 = vld [vmem:[%s14 + $0x48] sm:$0xff]
        %v1910 = vld [vmem:[%s14 + $0x50] sm:$0xff]
        %v1911 = vld [vmem:[%s14 + $0x58] sm:$0xff]
        %v1912 = vld [vmem:[%s14 + $0x60] sm:$0xff]
        %v1913 = vld [vmem:[%s14 + $0x68] sm:$0xff]
        %v1914 = vld [vmem:[%s14 + $0x70] sm:$0xff]
        %v1915 = vld [vmem:[%s14 + $0x78] sm:$0xff]
        %v1916 = vpack.c.bf16 %v1901, %v1900
        %v1917 = vpack.c.bf16 %v1903, %v1902
        %v1918 = vpack.c.bf16 %v1905, %v1904
        %v1919 = vpack.c.bf16 %v1907, %v1906
        %v1920 = vpack.c.bf16 %v1909, %v1908
        %v1921 = vpack.c.bf16 %v1911, %v1910
        %v1922 = vpack.c.bf16 %v1913, %v1912
        %v1923 = vpack.c.bf16 %v1915, %v1914
        %v1924 = vld [vmem:[%s15] sm:$0x1]
        %1925 = vmatprep.subr.bf16.mxu0 0
        %1926 = vmatpush1.bf16.msra.mxu0 %v1923
        %1927 = vmatprep.subr.bf16.mxu0 0
        %1928 = vmatpush1.bf16.msra.mxu0 %v1922
        %1929 = vmatprep.subr.bf16.mxu0 0
        %1930 = vmatpush1.bf16.msra.mxu0 %v1921
        %1931 = vmatprep.subr.bf16.mxu0 0
        %1932 = vmatpush1.bf16.msra.mxu0 %v1920
        %1933 = vmatprep.subr.bf16.mxu0 0
        %1934 = vmatpush1.bf16.msra.mxu0 %v1919
        %1935 = vmatprep.subr.bf16.mxu0 0
        %1936 = vmatpush1.bf16.msra.mxu0 %v1918
        %1937 = vmatprep.subr.bf16.mxu0 0
        %1938 = vmatpush1.bf16.msra.mxu0 %v1917
        %1939 = vmatprep.subr.bf16.mxu0 0
        %1940 = vmatpush1.bf16.msra.mxu0 %v1916
        %1941 = vmatprep.subr.bf16.mxu0 0
        %1942 = vmatpush2.bf16.msra.mxu0 0
        %1943 = vmatprep.subr.bf16.mxu0 0
        %1944 = vmatpush2.bf16.msra.mxu0 0
        %1945 = vmatprep.subr.bf16.mxu0 0
        %1946 = vmatpush2.bf16.msra.mxu0 0
        %1947 = vmatprep.subr.bf16.mxu0 0
        %1948 = vmatpush2.bf16.msra.mxu0 0
        %1949 = vmatprep.subr.bf16.mxu0 0
        %1950 = vmatpush2.bf16.msra.mxu0 0
        %1951 = vmatprep.subr.bf16.mxu0 0
        %1952 = vmatpush2.bf16.msra.mxu0 0
        %1953 = vmatprep.subr.bf16.mxu0 0
        %1954 = vmatpush2.bf16.msra.mxu0 0
        %1955 = vmatprep.subr.bf16.mxu0 0
        %1956 = vmatpush2.bf16.msra.mxu0 0
        %1957 = vmatprep.mubr.bf16.mxu0 0
        %1958 = vmatmul.mubr.bf16.gmra.mxu0 %v1899
        %v1959 = vpop.f32.mrf.mxu0
        %v1960 = vadd.f32 %v1924, %v1959
        %v1961 = vpop.f32.mrf.mxu0
        %v1962 = vpop.f32.mrf.mxu0
        %v1963 = vpop.f32.mrf.mxu0
        %1964 = vdwg.mxu0
        %v1965 = vmax.f32 %v1960, 0.0
        %v1966 = vpack.c.bf16 %v1965, %v1965
        %v1967 = vld [vmem:[%s16] sm:$0xff]
        %v1968 = vld [vmem:[%s16 + $0x8] sm:$0xff]
        %v1969 = vld [vmem:[%s16 + $0x10] sm:$0xff]
        %v1970 = vld [vmem:[%s16 + $0x18] sm:$0xff]
        %v1971 = vld [vmem:[%s16 + $0x20] sm:$0xff]
        %v1972 = vld [vmem:[%s16 + $0x28] sm:$0xff]
        %v1973 = vld [vmem:[%s16 + $0x30] sm:$0xff]
        %v1974 = vld [vmem:[%s16 + $0x38] sm:$0xff]
        %v1975 = vpack.c.bf16 %v1968, %v1967
        %v1976 = vpack.c.bf16 %v1970, %v1969
        %v1977 = vpack.c.bf16 %v1972, %v1971
        %v1978 = vpack.c.bf16 %v1974, %v1973
        %v1979 = vld [vmem:[%s17] sm:$0x1]
        %v1981 = vsel %vm1896, %v1966, 0
        %1983 = vmatprep.subr.bf16.mxu0 0
        %1984 = vmatpush1.bf16.msra.mxu0 0
        %1985 = vmatprep.subr.bf16.mxu0 0
        %1986 = vmatpush1.bf16.msra.mxu0 0
        %1987 = vmatprep.subr.bf16.mxu0 0
        %1988 = vmatpush1.bf16.msra.mxu0 0
        %1989 = vmatprep.subr.bf16.mxu0 0
        %1990 = vmatpush1.bf16.msra.mxu0 0
        %1991 = vmatprep.subr.bf16.mxu0 0
        %1992 = vmatpush1.bf16.msra.mxu0 %v1978
        %1993 = vmatprep.subr.bf16.mxu0 0
        %1994 = vmatpush1.bf16.msra.mxu0 %v1977
        %1995 = vmatprep.subr.bf16.mxu0 0
        %1996 = vmatpush1.bf16.msra.mxu0 %v1976
        %1997 = vmatprep.subr.bf16.mxu0 0
        %1998 = vmatpush1.bf16.msra.mxu0 %v1975
        %1999 = vmatprep.subr.bf16.mxu0 0
        %2000 = vmatpush2.bf16.msra.mxu0 0
        %2001 = vmatprep.subr.bf16.mxu0 0
        %2002 = vmatpush2.bf16.msra.mxu0 0
        %2003 = vmatprep.subr.bf16.mxu0 0
        %2004 = vmatpush2.bf16.msra.mxu0 0
        %2005 = vmatprep.subr.bf16.mxu0 0
        %2006 = vmatpush2.bf16.msra.mxu0 0
        %2007 = vmatprep.subr.bf16.mxu0 0
        %2008 = vmatpush2.bf16.msra.mxu0 0
        %2009 = vmatprep.subr.bf16.mxu0 0
        %2010 = vmatpush2.bf16.msra.mxu0 0
        %2011 = vmatprep.subr.bf16.mxu0 0
        %2012 = vmatpush2.bf16.msra.mxu0 0
        %2013 = vmatprep.subr.bf16.mxu0 0
        %2014 = vmatpush2.bf16.msra.mxu0 0
        %2015 = vmatprep.mubr.bf16.mxu0 0
        %2016 = vmatmul.mubr.bf16.gmra.mxu0 %v1981
        %v2017 = vpop.f32.mrf.mxu0
        %v2018 = vadd.f32 %v1979, %v2017
        %v2019 = vpop.f32.mrf.mxu0
        %v2020 = vpop.f32.mrf.mxu0
        %v2021 = vpop.f32.mrf.mxu0
        %2022 = vdwg.mxu0
        %vm2023 = vcmask 8192
        %2024 = vst.msk [vmem:[%s565] sm:$0x1] %vm2023, %v2018
        %s2025 = sand.u32 %s423, 1
        %s2026 = scalar_lea.sflag [#allocation3], %s2025
        %s2027 = sand.u32 %s423, 1
        %s2028 = scalar_lea.vmem [#allocation2], %s2027
        // Predicated region
        $region93: #{sccnn_attention_forward.1} parent=91 // pred_check
          %p2029 = pneg %p433
        $region94: #{sccnn_attention_forward.1} parent=91 // pred_check_branch
          %2031 = sbr.rel (%p2029) target = $region96
        $region95: #{sccnn_attention_forward.1} parent=91 // pred_region
          %s2033 = ssub.s32 16, 16
          %2034 = vsyncadd %s2026, %s2033
          %s2035 = smul.addr %s32, 16
          %s2036 = scalar_lea.hbm %s18, %s2035
          %s2038 = sshll.u32 %s2028, 4
          %s2039 = int_to_ptr.vmem [resolvable:$true] %s2038
          %2041 = dma.vmem_to_hbm [thread:$0]  %s2039, 16, %s2036, %s2026
        $region96: #{sccnn_attention_forward.1} parent=91 // pred_fallthru
          _
      $region92: #{sccnn_attention_forward.1} parent=5 // pred_fallthru
        _
      %p2042 = scmp.le.s32.totalorder 2, %s27
      // Predicated region
      $region97: #{sccnn_attention_forward.1} parent=5 // pred_check
        %p2043 = pneg %p2042
      $region98: #{sccnn_attention_forward.1} parent=5 // pred_check_branch
        %2045 = sbr.rel (%p2043) target = $region100
      $region99: #{sccnn_attention_forward.1} parent=5 // pred_region
        %s2046 = ssub.s32 %s27, 2
        // Predicated region
        $region101: #{sccnn_attention_forward.1} parent=99 // pred_check
          %p2047 = pneg %p439
        $region102: #{sccnn_attention_forward.1} parent=99 // pred_check_branch
          %2049 = sbr.rel (%p2047) target = $region104
        $region103: #{sccnn_attention_forward.1} parent=99 // pred_region
          %s2050 = sand.u32 %s424, 1
          %s2051 = scalar_lea.sflag [#allocation3], %s2050
          %s2052 = sand.u32 %s424, 1
          %s2053 = scalar_lea.vmem [#allocation2], %s2052
          %2054 = dma.done %s2051, 16
        $region104: #{sccnn_attention_forward.1} parent=99 // pred_fallthru
          _
      $region100: #{sccnn_attention_forward.1} parent=5 // pred_fallthru
        _
    $region6: #{sccnn_attention_forward.1} parent=1 // loop_footer
      %s31 = sadd.s32 1, %s27
    $region7: #{sccnn_attention_forward.1} parent=1 // loop_footer_branch
      %26 = sbr.rel target = $region3
    $region8: #{sccnn_attention_forward.1} parent=1 // loop_exit
      _
    %2055 = vsyncpa [#allocation3], 1
    %s2056 = scalar_lea.sflag [#allocation3], 1
    %2057 = vsyncpa %s2056, 1

</llo_original>
